<compile_context>
chip_gen: v7x
topology: tpu7x:2x2x1
jax: 0.10.0
libtpu: 0.0.40
codegen_flags: <defaults>
</compile_context>

<pallas_src>
import jax
import jax.numpy as jnp
from jax.experimental import pallas as pl
from jax.experimental.pallas import tpu as pltpu


def _round_up(n, m):
    return ((n + m - 1) // m) * m


def _cdiv(a, b):
    return -(-a // b)


_VMEM_TILE_BUDGET = 16 * 1024 * 1024   # bytes used when sizing the batch tile
_VMEM_LIMIT = 32 * 1024 * 1024         # raised scoped-VMEM limit (fits v5e/v6e/v7x)


def mlp_kernel(x_ref, w1_ref, b1_ref, w2_ref, b2_ref, w3_ref, b3_ref, o_ref):
    """One batch tile of the fused MLP.

    x_ref : (TM, D) f32 — batch-major, exactly as x lives in HBM (no wrapper copy).
    o_ref : (1, TM) f32 — lane-dense output block (batch on the lane axis).
    """
    prec = jax.lax.Precision.HIGHEST  # f32 parity with PyTorch's f32 GEMMs

    # Put the batch on the lane axis once, in-kernel; the BlockSpec pipeline overlaps
    # this with the next tile's DMA.  Everything downstream stays lane-dense.
    xT = x_ref[...].T                                                   # (D, TM)

    # Linear(D, 10) + ReLU
    h1 = jnp.dot(w1_ref[...], xT, preferred_element_type=jnp.float32, precision=prec)
    h1 = jnp.maximum(h1 + b1_ref[...], 0.0)                             # (10, TM)

    # Dropout(0.2): identity in eval mode.
    # TODO(synk): training-mode dropout (pltpu.prng_random_bits mask + 1/0.8 scale).

    # Linear(10, 15) + ReLU
    h2 = jnp.dot(w2_ref[...], h1, preferred_element_type=jnp.float32, precision=prec)
    h2 = jnp.maximum(h2 + b2_ref[...], 0.0)                             # (15, TM)

    # Linear(15, 1)
    out = jnp.dot(w3_ref[...], h2, preferred_element_type=jnp.float32, precision=prec)
    o_ref[...] = (out + b3_ref[0, 0]).astype(o_ref.dtype)               # (1, TM) lane-dense


def _choose_block_rows(B, D):
    """Batch-tile (lane) size TM: as big as the VMEM budget allows, multiple of 128,
    while keeping >= ~4 grid steps for large B (v7x megacore) and TM <= padded batch."""
    lane_d = max(_round_up(D, 128), 128)               # (TM, D) tile is lane-padded in VMEM
    bytes_per_row = 4 * (2 * lane_d                    # x tile, double-buffered
                         + 2 * 8                       # (1, TM) out tile, 8-sublane pad, x2
                         + _round_up(D, 8) + 16 + 16)  # xT / h1 / h2 intermediates
    tm = _VMEM_TILE_BUDGET // bytes_per_row
    tm = max(128, (tm // 128) * 128)
    tm = min(tm, max(128, _round_up(_cdiv(B, 4), 128)))  # >= ~4 steps when B is large
    tm = min(tm, _round_up(B, 128))                      # never bigger than the batch
    return tm


def house_mlp(x, params):
    """x: (B, D) float32.  params hold PyTorch-layout weights (out, in).  Returns (B, 1)."""
    w1, b1, w2, b2, w3, b3 = (
        params["w1"], params["b1"], params["w2"],
        params["b2"], params["w3"], params["b3"],
    )
    B, D = x.shape
    TM = _choose_block_rows(B, D)
    grid = (pl.cdiv(B, TM),)   # no explicit padding: last block overhang is masked

    out_T = pl.pallas_call(
        mlp_kernel,
        out_shape=jax.ShapeDtypeStruct((1, B), x.dtype),
        grid=grid,
        in_specs=[
            pl.BlockSpec((TM, D), lambda i: (i, 0)),            # x straight from HBM, batch-major
            pl.BlockSpec(w1.shape, lambda i: (0, 0)),            # weights/biases stay resident
            pl.BlockSpec(b1.shape, lambda i: (0, 0)),
            pl.BlockSpec(w2.shape, lambda i: (0, 0)),
            pl.BlockSpec(b2.shape, lambda i: (0, 0)),
            pl.BlockSpec(w3.shape, lambda i: (0, 0)),
            pl.BlockSpec(memory_space=pltpu.MemorySpace.SMEM),   # scalar b3 in SMEM
        ],
        out_specs=pl.BlockSpec((1, TM), lambda i: (0, i)),       # lane-dense output block
        compiler_params=pltpu.CompilerParams(
            dimension_semantics=("parallel",),                   # megacore split over batch
            vmem_limit_bytes=_VMEM_LIMIT,
        ),
    )(x, w1, b1, w2, b2, w3, b3)

    return out_T.T  # (B, 1)


def init_params(key, input_size):
    """Deterministic init mimicking PyTorch uniform(-1/sqrt(fan_in), 1/sqrt(fan_in)).
    Weights stored in PyTorch layout (out_features, in_features); biases as (out, 1)."""
    ks = jax.random.split(key, 6)

    def lin(kw, kb, fan_in, fan_out):
        bound = 1.0 / jnp.sqrt(fan_in)
        w = jax.random.uniform(kw, (fan_out, fan_in), jnp.float32, -bound, bound)
        b = jax.random.uniform(kb, (fan_out, 1), jnp.float32, -bound, bound)
        return w, b

    w1, b1 = lin(ks[0], ks[1], input_size, 10)
    w2, b2 = lin(ks[2], ks[3], 10, 15)
    w3, b3 = lin(ks[4], ks[5], 15, 1)
    return {"w1": w1, "b1": b1, "w2": w2, "b2": b2, "w3": w3, "b3": b3}


if __name__ == "__main__":
    key = jax.random.PRNGKey(0)
    k_x, k_p = jax.random.split(key)

    # Small but representative: batch=300 gives a 3-step grid with a partial last block
    # (exercises the no-pad overhang path and the in-kernel transpose).
    batch, input_size = 300, 8
    x = jax.random.normal(k_x, (batch, input_size), dtype=jnp.float32)
    params = init_params(k_p, input_size)

    out = house_mlp(x, params)
    jax.block_until_ready(out)

    # Reference check in plain JAX (eval-mode forward, same HIGHEST-precision dots).
    prec = jax.lax.Precision.HIGHEST
    h1 = jnp.maximum(jnp.dot(x, params["w1"].T, precision=prec) + params["b1"].T, 0.0)
    h2 = jnp.maximum(jnp.dot(h1, params["w2"].T, precision=prec) + params["b2"].T, 0.0)
    ref = jnp.dot(h2, params["w3"].T, precision=prec) + params["b3"].T

    assert out.shape == (batch, 1), out.shape
    assert jnp.allclose(out, ref, atol=1e-5), "mismatch vs reference"

    print("KERNEL_OK")
</pallas_src>

<mosaic_0001>
module attributes {stable_mosaic.version = 11 : i64} {
  func.func @mlp_kernel(%arg0: i32, %arg1: memref<128x8xf32, #tpu.memory_space<vmem>>, %arg2: memref<10x8xf32, #tpu.memory_space<vmem>>, %arg3: memref<10x1xf32, #tpu.memory_space<vmem>>, %arg4: memref<15x10xf32, #tpu.memory_space<vmem>>, %arg5: memref<15x1xf32, #tpu.memory_space<vmem>>, %arg6: memref<1x15xf32, #tpu.memory_space<vmem>>, %arg7: memref<1x1xf32, #tpu.memory_space<smem>>, %arg8: memref<1x128xf32, #tpu.memory_space<vmem>>) attributes {dimension_semantics = [#tpu.dimension_semantics<parallel>], iteration_bounds = array<i64: 3>, scalar_prefetch = 0 : i64, scratch_operands = 0 : i64, tpu.core_type = #tpu.core_type<tc>, window_params = [{transform_indices = @transform_0, window_bounds = array<i64: 128, 8>}, {pipeline_mode = #tpu.pipeline_mode<synchronous>, transform_indices = @transform_1, window_bounds = array<i64: 10, 8>}, {pipeline_mode = #tpu.pipeline_mode<synchronous>, transform_indices = @transform_2, window_bounds = array<i64: 10, 1>}, {pipeline_mode = #tpu.pipeline_mode<synchronous>, transform_indices = @transform_3, window_bounds = array<i64: 15, 10>}, {pipeline_mode = #tpu.pipeline_mode<synchronous>, transform_indices = @transform_4, window_bounds = array<i64: 15, 1>}, {pipeline_mode = #tpu.pipeline_mode<synchronous>, transform_indices = @transform_5, window_bounds = array<i64: 1, 15>}, {transform_indices = @transform_6, window_bounds = array<i64: 1, 1>}, {transform_indices = @transform_7, window_bounds = array<i64: 1, 128>}]} {
    %c0 = arith.constant 0 : index
    %c0_0 = arith.constant 0 : index
    %0 = vector.load %arg1[%c0, %c0_0] : memref<128x8xf32, #tpu.memory_space<vmem>>, vector<128x8xf32>
    %1 = tpu.transpose %0, [1, 0] : vector<128x8xf32> -> vector<8x128xf32>
    %c0_1 = arith.constant 0 : index
    %c0_2 = arith.constant 0 : index
    %2 = vector.load %arg2[%c0_1, %c0_2] : memref<10x8xf32, #tpu.memory_space<vmem>>, vector<10x8xf32>
    %cst = arith.constant dense<0.000000e+00> : vector<10x128xf32>
    %3 = tpu.matmul %2, %1, %cst {dimension_numbers = #tpu.dot_dimension_numbers<[1], [0], [0], [1], [0, 0, 1, 1], [], []>, precision = #tpu.contract_precision<fp32>} : vector<10x8xf32>, vector<8x128xf32>, vector<10x128xf32> -> vector<10x128xf32>
    %c0_3 = arith.constant 0 : index
    %c0_4 = arith.constant 0 : index
    %4 = vector.load %arg3[%c0_3, %c0_4] : memref<10x1xf32, #tpu.memory_space<vmem>>, vector<10x1xf32>
    %5 = vector.broadcast %4 : vector<10x1xf32> to vector<10x128xf32>
    %6 = arith.addf %3, %5 : vector<10x128xf32>
    %cst_5 = arith.constant 0.000000e+00 : f32
    %7 = vector.broadcast %cst_5 : f32 to vector<10x128xf32>
    %8 = arith.maximumf %6, %7 : vector<10x128xf32>
    %c0_6 = arith.constant 0 : index
    %c0_7 = arith.constant 0 : index
    %9 = vector.load %arg4[%c0_6, %c0_7] : memref<15x10xf32, #tpu.memory_space<vmem>>, vector<15x10xf32>
    %cst_8 = arith.constant dense<0.000000e+00> : vector<15x128xf32>
    %10 = tpu.matmul %9, %8, %cst_8 {dimension_numbers = #tpu.dot_dimension_numbers<[1], [0], [0], [1], [0, 0, 1, 1], [], []>, precision = #tpu.contract_precision<fp32>} : vector<15x10xf32>, vector<10x128xf32>, vector<15x128xf32> -> vector<15x128xf32>
    %c0_9 = arith.constant 0 : index
    %c0_10 = arith.constant 0 : index
    %11 = vector.load %arg5[%c0_9, %c0_10] : memref<15x1xf32, #tpu.memory_space<vmem>>, vector<15x1xf32>
    %12 = vector.broadcast %11 : vector<15x1xf32> to vector<15x128xf32>
    %13 = arith.addf %10, %12 : vector<15x128xf32>
    %cst_11 = arith.constant 0.000000e+00 : f32
    %14 = vector.broadcast %cst_11 : f32 to vector<15x128xf32>
    %15 = arith.maximumf %13, %14 : vector<15x128xf32>
    %c0_12 = arith.constant 0 : index
    %c0_13 = arith.constant 0 : index
    %16 = vector.load %arg6[%c0_12, %c0_13] : memref<1x15xf32, #tpu.memory_space<vmem>>, vector<1x15xf32>
    %cst_14 = arith.constant dense<0.000000e+00> : vector<1x128xf32>
    %17 = tpu.matmul %16, %15, %cst_14 {dimension_numbers = #tpu.dot_dimension_numbers<[1], [0], [0], [1], [0, 0, 1, 1], [], []>, precision = #tpu.contract_precision<fp32>} : vector<1x15xf32>, vector<15x128xf32>, vector<1x128xf32> -> vector<1x128xf32>
    %c0_15 = arith.constant 0 : index
    %c0_16 = arith.constant 0 : index
    %18 = memref.load %arg7[%c0_15, %c0_16] : memref<1x1xf32, #tpu.memory_space<smem>>
    %19 = vector.broadcast %18 : f32 to vector<1x128xf32>
    %20 = arith.addf %17, %19 : vector<1x128xf32>
    %c0_17 = arith.constant 0 : index
    %c0_18 = arith.constant 0 : index
    %21 = vector.load %arg8[%c0_17, %c0_18] : memref<1x128xf32, #tpu.memory_space<vmem>>, vector<1x128xf32>
    tpu.vector_store %arg8[%c0_17, %c0_18], %20 {strides = array<i32>} : memref<1x128xf32, #tpu.memory_space<vmem>>, vector<1x128xf32>,
    return
  }
  func.func @transform_0(%arg0: i32) -> (i32, i32) {
    %c0_i32 = arith.constant 0 : i32
    %c0_i32_0 = arith.constant 0 : i32
    return %arg0, %c0_i32 : i32, i32
  }
  func.func @transform_1(%arg0: i32) -> (i32, i32) {
    %c0_i32 = arith.constant 0 : i32
    %c0_i32_0 = arith.constant 0 : i32
    %c0_i32_1 = arith.constant 0 : i32
    return %c0_i32, %c0_i32_0 : i32, i32
  }
  func.func @transform_2(%arg0: i32) -> (i32, i32) {
    %c0_i32 = arith.constant 0 : i32
    %c0_i32_0 = arith.constant 0 : i32
    %c0_i32_1 = arith.constant 0 : i32
    return %c0_i32, %c0_i32_0 : i32, i32
  }
  func.func @transform_3(%arg0: i32) -> (i32, i32) {
    %c0_i32 = arith.constant 0 : i32
    %c0_i32_0 = arith.constant 0 : i32
    %c0_i32_1 = arith.constant 0 : i32
    return %c0_i32, %c0_i32_0 : i32, i32
  }
  func.func @transform_4(%arg0: i32) -> (i32, i32) {
    %c0_i32 = arith.constant 0 : i32
    %c0_i32_0 = arith.constant 0 : i32
    %c0_i32_1 = arith.constant 0 : i32
    return %c0_i32, %c0_i32_0 : i32, i32
  }
  func.func @transform_5(%arg0: i32) -> (i32, i32) {
    %c0_i32 = arith.constant 0 : i32
    %c0_i32_0 = arith.constant 0 : i32
    %c0_i32_1 = arith.constant 0 : i32
    return %c0_i32, %c0_i32_0 : i32, i32
  }
  func.func @transform_6(%arg0: i32) -> (i32, i32) {
    %c0_i32 = arith.constant 0 : i32
    %c0_i32_0 = arith.constant 0 : i32
    %c0_i32_1 = arith.constant 0 : i32
    return %c0_i32, %c0_i32_0 : i32, i32
  }
  func.func @transform_7(%arg0: i32) -> (i32, i32) {
    %c0_i32 = arith.constant 0 : i32
    %c0_i32_0 = arith.constant 0 : i32
    return %c0_i32, %arg0 : i32, i32
  }
}

</mosaic_0001>

<llo_original>
// kernel: tpu_custom_call.1
$region0: #{tpu_custom_call.1}
  #allocation0 [shape = 'u32[]', space=smem, size = 0x4, offset = 0x4, fixed_abs, tag = 'smem constant byte address 0x4 - core index']
  #allocation1 [shape = 'u32[144,128]{1,0:T(1,128)}', space=vmem, size = 0x12000, scoped, tag = 'internal scratch']
  #allocation2 [shape = 'f32[1,1]{1,0:T(1,128)S(6)}', space=smem, size = 0x200, scoped, tag = 'scoped memory for tpu_custom_call.1']
  %s0 = inlined_call_operand.vmem [shape: f32[300,8], index: 0, kind: input, shape index: {}]
  %s1 = inlined_call_operand.vmem [shape: f32[10,8], index: 1, kind: input, shape index: {}]
  %s2 = inlined_call_operand.vmem [shape: f32[10,1], index: 2, kind: input, shape index: {}]
  %s3 = inlined_call_operand.vmem [shape: f32[15,10], index: 3, kind: input, shape index: {}]
  %s4 = inlined_call_operand.vmem [shape: f32[15,1], index: 4, kind: input, shape index: {}]
  %s5 = inlined_call_operand.vmem [shape: f32[1,15], index: 5, kind: input, shape index: {}]
  %s6 = inlined_call_operand.<no memory space> [shape: f32[1,1], index: 6, kind: input, shape index: {}]
  %s7 = inlined_call_operand.hbm [shape: f32[1,300], index: 7, kind: output, shape index: {}]
  %s8 = sld [smem:[#allocation0]]
  $region61: #{tpu_custom_call.1} parent=0
    _
  %s10 = ssub.s32 1, %s8
  %s11 = scalar_select 0, %s10, %s8
  %12 = sst [smem:[#allocation2]] %s6
  $region1: #{tpu_custom_call.1} parent=0
    #allocation3 [shape = 'u8[1024]{0}', space=vmem, size = 0x400, scoped, tag = 'output window, operand 0']
    #allocation4 [shape = 's32[2]{0}', space=sflag, size = 0x8, scoped, tag = 'scoped memory for tpu_custom_call.1']
    %13 = vsyncpa [#allocation4], 0
    %s14 = scalar_lea.sflag [#allocation4], 1
    %15 = vsyncpa %s14, 0
    loop: start=0, step=1, limit=5
    $region2: #{tpu_custom_call.1} parent=1 // loop_pre_header
      _
    $region3: #{tpu_custom_call.1} parent=1 // loop_header
      %s17 = sphi 0, %s21
      %p18 = scmp.ge.s32.totalorder %s17, 5
      %s27 = sphi 0, %s29
      %s30 = sphi 0, %s27
      %s31 = sphi 0, %s30
      %s47 = sphi 0, %s31
      %s51 = sphi 0, %s51
      %s53 = sphi 0, %s51
      %s54 = sphi 0, %s53
      %s68 = sphi 0, %s54
      %s72 = sphi 0, %s72
      %s74 = sphi 0, %s72
      %s75 = sphi 0, %s74
      %s89 = sphi 0, %s75
      %s93 = sphi 0, %s93
      %s95 = sphi 0, %s93
      %s96 = sphi 0, %s95
      %s110 = sphi 0, %s96
      %s114 = sphi 0, %s114
      %s116 = sphi 0, %s114
      %s117 = sphi 0, %s116
      %s131 = sphi 0, %s117
      %s135 = sphi 0, %s135
      %s137 = sphi 0, %s135
      %s138 = sphi 0, %s137
      %s152 = sphi 0, %s138
      %s156 = sphi 0, %s156
      %s158 = sphi 0, %s156
      %s159 = sphi 0, %s158
      %s173 = sphi 0, %s159
      %s179 = sphi 0, %s181
      %s182 = sphi 0, %s179
      %s183 = sphi 0, %s182
      %s199 = sphi 0, %s183
    $region4: #{tpu_custom_call.1} parent=1 // loop_header_branch
      %20 = sbr.rel (%p18) target = $region8
    $region5: #{tpu_custom_call.1} parent=1 // loop_body
      %s22 = ssub.s32 %s17, 1
      %s23 = ssub.s32 %s17, 2
      %s24 = sadd.s32 %s17, 1
      %s25 = ssub.s32 %s17, %s24
      %p26 = scmp.eq.s32.totalorder %s25, 0
      %s28 = sadd.s32 %s27, 1
      %s29 = scalar_select %p26, %s27, %s28
      %p32 = pneg %p26
      %p33 = scmp.eq.s32.totalorder %s17, 2
      %p34 = por %p32, %p33
      %p35 = scmp.ne.s32.totalorder %s27, %s30
      %p36 = scmp.eq.s32.totalorder %s17, 0
      %p37 = por %p35, %p36
      %p38 = scmp.ne.s32.totalorder %s27, %s30
      %p39 = scmp.eq.s32.totalorder %s22, 2
      %p40 = por %p38, %p39
      %p41 = scmp.ne.s32.totalorder %s30, %s31
      %p42 = scmp.eq.s32.totalorder %s22, 0
      %p43 = por %p41, %p42
      %p44 = scmp.ne.s32.totalorder %s30, %s31
      %p45 = scmp.eq.s32.totalorder %s23, 2
      %p46 = por %p44, %p45
      %p48 = scmp.ne.s32.totalorder %s31, %s47
      %p49 = scmp.eq.s32.totalorder %s23, 0
      %p50 = por %p48, %p49
      %s52 = sadd.s32 %s51, 1
      %p55 = scmp.eq.s32.totalorder %s17, 2
      %p56 = scmp.ne.s32.totalorder %s51, %s53
      %p57 = scmp.eq.s32.totalorder %s17, 0
      %p58 = por %p56, %p57
      %p59 = scmp.ne.s32.totalorder %s51, %s53
      %p60 = scmp.eq.s32.totalorder %s22, 2
      %p61 = por %p59, %p60
      %p62 = scmp.ne.s32.totalorder %s53, %s54
      %p63 = scmp.eq.s32.totalorder %s22, 0
      %p64 = por %p62, %p63
      %p65 = scmp.ne.s32.totalorder %s53, %s54
      %p66 = scmp.eq.s32.totalorder %s23, 2
      %p67 = por %p65, %p66
      %p69 = scmp.ne.s32.totalorder %s54, %s68
      %p70 = scmp.eq.s32.totalorder %s23, 0
      %p71 = por %p69, %p70
      %s73 = sadd.s32 %s72, 1
      %p76 = scmp.eq.s32.totalorder %s17, 2
      %p77 = scmp.ne.s32.totalorder %s72, %s74
      %p78 = scmp.eq.s32.totalorder %s17, 0
      %p79 = por %p77, %p78
      %p80 = scmp.ne.s32.totalorder %s72, %s74
      %p81 = scmp.eq.s32.totalorder %s22, 2
      %p82 = por %p80, %p81
      %p83 = scmp.ne.s32.totalorder %s74, %s75
      %p84 = scmp.eq.s32.totalorder %s22, 0
      %p85 = por %p83, %p84
      %p86 = scmp.ne.s32.totalorder %s74, %s75
      %p87 = scmp.eq.s32.totalorder %s23, 2
      %p88 = por %p86, %p87
      %p90 = scmp.ne.s32.totalorder %s75, %s89
      %p91 = scmp.eq.s32.totalorder %s23, 0
      %p92 = por %p90, %p91
      %s94 = sadd.s32 %s93, 1
      %p97 = scmp.eq.s32.totalorder %s17, 2
      %p98 = scmp.ne.s32.totalorder %s93, %s95
      %p99 = scmp.eq.s32.totalorder %s17, 0
      %p100 = por %p98, %p99
      %p101 = scmp.ne.s32.totalorder %s93, %s95
      %p102 = scmp.eq.s32.totalorder %s22, 2
      %p103 = por %p101, %p102
      %p104 = scmp.ne.s32.totalorder %s95, %s96
      %p105 = scmp.eq.s32.totalorder %s22, 0
      %p106 = por %p104, %p105
      %p107 = scmp.ne.s32.totalorder %s95, %s96
      %p108 = scmp.eq.s32.totalorder %s23, 2
      %p109 = por %p107, %p108
      %p111 = scmp.ne.s32.totalorder %s96, %s110
      %p112 = scmp.eq.s32.totalorder %s23, 0
      %p113 = por %p111, %p112
      %s115 = sadd.s32 %s114, 1
      %p118 = scmp.eq.s32.totalorder %s17, 2
      %p119 = scmp.ne.s32.totalorder %s114, %s116
      %p120 = scmp.eq.s32.totalorder %s17, 0
      %p121 = por %p119, %p120
      %p122 = scmp.ne.s32.totalorder %s114, %s116
      %p123 = scmp.eq.s32.totalorder %s22, 2
      %p124 = por %p122, %p123
      %p125 = scmp.ne.s32.totalorder %s116, %s117
      %p126 = scmp.eq.s32.totalorder %s22, 0
      %p127 = por %p125, %p126
      %p128 = scmp.ne.s32.totalorder %s116, %s117
      %p129 = scmp.eq.s32.totalorder %s23, 2
      %p130 = por %p128, %p129
      %p132 = scmp.ne.s32.totalorder %s117, %s131
      %p133 = scmp.eq.s32.totalorder %s23, 0
      %p134 = por %p132, %p133
      %s136 = sadd.s32 %s135, 1
      %p139 = scmp.eq.s32.totalorder %s17, 2
      %p140 = scmp.ne.s32.totalorder %s135, %s137
      %p141 = scmp.eq.s32.totalorder %s17, 0
      %p142 = por %p140, %p141
      %p143 = scmp.ne.s32.totalorder %s135, %s137
      %p144 = scmp.eq.s32.totalorder %s22, 2
      %p145 = por %p143, %p144
      %p146 = scmp.ne.s32.totalorder %s137, %s138
      %p147 = scmp.eq.s32.totalorder %s22, 0
      %p148 = por %p146, %p147
      %p149 = scmp.ne.s32.totalorder %s137, %s138
      %p150 = scmp.eq.s32.totalorder %s23, 2
      %p151 = por %p149, %p150
      %p153 = scmp.ne.s32.totalorder %s138, %s152
      %p154 = scmp.eq.s32.totalorder %s23, 0
      %p155 = por %p153, %p154
      %s157 = sadd.s32 %s156, 1
      %p160 = scmp.eq.s32.totalorder %s17, 2
      %p161 = scmp.ne.s32.totalorder %s156, %s158
      %p162 = scmp.eq.s32.totalorder %s17, 0
      %p163 = por %p161, %p162
      %p164 = scmp.ne.s32.totalorder %s156, %s158
      %p165 = scmp.eq.s32.totalorder %s22, 2
      %p166 = por %p164, %p165
      %p167 = scmp.ne.s32.totalorder %s158, %s159
      %p168 = scmp.eq.s32.totalorder %s22, 0
      %p169 = por %p167, %p168
      %p170 = scmp.ne.s32.totalorder %s158, %s159
      %p171 = scmp.eq.s32.totalorder %s23, 2
      %p172 = por %p170, %p171
      %p174 = scmp.ne.s32.totalorder %s159, %s173
      %p175 = scmp.eq.s32.totalorder %s23, 0
      %p176 = por %p174, %p175
      %s177 = ssub.s32 %s17, %s24
      %p178 = scmp.eq.s32.totalorder %s177, 0
      %s180 = sadd.s32 %s179, 1
      %s181 = scalar_select %p178, %s179, %s180
      %p184 = pneg %p178
      %p185 = scmp.eq.s32.totalorder %s17, 2
      %p186 = por %p184, %p185
      %p187 = scmp.ne.s32.totalorder %s179, %s182
      %p188 = scmp.eq.s32.totalorder %s17, 0
      %p189 = por %p187, %p188
      %p190 = scmp.ne.s32.totalorder %s179, %s182
      %p191 = scmp.eq.s32.totalorder %s22, 2
      %p192 = por %p190, %p191
      %p193 = scmp.ne.s32.totalorder %s182, %s183
      %p194 = scmp.eq.s32.totalorder %s22, 0
      %p195 = por %p193, %p194
      %p196 = scmp.ne.s32.totalorder %s182, %s183
      %p197 = scmp.eq.s32.totalorder %s23, 2
      %p198 = por %p196, %p197
      %p200 = scmp.ne.s32.totalorder %s183, %s199
      %p201 = scmp.eq.s32.totalorder %s23, 0
      %p202 = por %p200, %p201
      %p203 = scmp.le.s32.totalorder 1, %s17
      %p204 = scmp.lt.s32.totalorder %s17, 4
      %p205 = pnand %p203, %p204
      %p206 = pneg %p205
      // Predicated region
      $region9: #{tpu_custom_call.1} parent=5 // pred_check
        _
      $region10: #{tpu_custom_call.1} parent=5 // pred_check_branch
        %208 = sbr.rel (%p205) target = $region12
      $region11: #{tpu_custom_call.1} parent=5 // pred_region
        %s209 = ssub.s32 %s17, 1
        // Predicated region
        $region13: #{tpu_custom_call.1} parent=11 // pred_check
          %p210 = pneg %p64
        $region14: #{tpu_custom_call.1} parent=11 // pred_check_branch
          %212 = sbr.rel (%p210) target = $region16
        $region15: #{tpu_custom_call.1} parent=11 // pred_region
          _
        $region16: #{tpu_custom_call.1} parent=11 // pred_fallthru
          _
        // Predicated region
        $region17: #{tpu_custom_call.1} parent=11 // pred_check
          %p213 = pneg %p85
        $region18: #{tpu_custom_call.1} parent=11 // pred_check_branch
          %215 = sbr.rel (%p213) target = $region20
        $region19: #{tpu_custom_call.1} parent=11 // pred_region
          _
        $region20: #{tpu_custom_call.1} parent=11 // pred_fallthru
          _
        // Predicated region
        $region21: #{tpu_custom_call.1} parent=11 // pred_check
          %p216 = pneg %p106
        $region22: #{tpu_custom_call.1} parent=11 // pred_check_branch
          %218 = sbr.rel (%p216) target = $region24
        $region23: #{tpu_custom_call.1} parent=11 // pred_region
          _
        $region24: #{tpu_custom_call.1} parent=11 // pred_fallthru
          _
        // Predicated region
        $region25: #{tpu_custom_call.1} parent=11 // pred_check
          %p219 = pneg %p127
        $region26: #{tpu_custom_call.1} parent=11 // pred_check_branch
          %221 = sbr.rel (%p219) target = $region28
        $region27: #{tpu_custom_call.1} parent=11 // pred_region
          _
        $region28: #{tpu_custom_call.1} parent=11 // pred_fallthru
          _
        // Predicated region
        $region29: #{tpu_custom_call.1} parent=11 // pred_check
          %p222 = pneg %p148
        $region30: #{tpu_custom_call.1} parent=11 // pred_check_branch
          %224 = sbr.rel (%p222) target = $region32
        $region31: #{tpu_custom_call.1} parent=11 // pred_region
          _
        $region32: #{tpu_custom_call.1} parent=11 // pred_fallthru
          _
        // Predicated region
        $region33: #{tpu_custom_call.1} parent=11 // pred_check
          %p225 = pneg %p169
        $region34: #{tpu_custom_call.1} parent=11 // pred_check_branch
          %227 = sbr.rel (%p225) target = $region36
        $region35: #{tpu_custom_call.1} parent=11 // pred_region
          _
        $region36: #{tpu_custom_call.1} parent=11 // pred_fallthru
          _
      $region12: #{tpu_custom_call.1} parent=5 // pred_fallthru
        _
      %p228 = scmp.lt.s32.totalorder %s17, 3
      // Predicated region
      $region37: #{tpu_custom_call.1} parent=5 // pred_check
        %p229 = pneg %p228
      $region38: #{tpu_custom_call.1} parent=5 // pred_check_branch
        %231 = sbr.rel (%p229) target = $region40
      $region39: #{tpu_custom_call.1} parent=5 // pred_region
        // Predicated region
        $region41: #{tpu_custom_call.1} parent=39 // pred_check
          %p232 = pneg %p37
        $region42: #{tpu_custom_call.1} parent=39 // pred_check_branch
          %234 = sbr.rel (%p232) target = $region44
        $region43: #{tpu_custom_call.1} parent=39 // pred_region
          %s235 = smul.u32 16, %s17
          %s236 = ssub.s32 38, %s235
          %p237 = scmp.lt.s32.totalorder %s236, 16
          %s238 = scalar_select %p237, %s236, 16
          %s239 = smul.u32 128, %s238
          %p240 = scmp.lt.s32.totalorder %s235, 37
          %s241 = scalar_select %p240, %s235, 37
          %s242 = smul.addr %s241, 8
          %s243 = scalar_lea.vmem %s0, %s242
          %s244 = smul.u32 16, %s17
          %s245 = ssub.s32 38, %s244
          %p246 = scmp.lt.s32.totalorder %s245, 16
          %s247 = scalar_select %p246, %s245, 16
          %s248 = smul.u32 128, %s247
        $region44: #{tpu_custom_call.1} parent=39 // pred_fallthru
          _
      $region40: #{tpu_custom_call.1} parent=5 // pred_fallthru
        _
      %p249 = scmp.le.s32.totalorder 1, %s17
      %p250 = scmp.lt.s32.totalorder %s17, 4
      %p251 = pnand %p249, %p250
      %p252 = pneg %p251
      // Predicated region
      $region45: #{tpu_custom_call.1} parent=5 // pred_check
        _
      $region46: #{tpu_custom_call.1} parent=5 // pred_check_branch
        %254 = sbr.rel (%p251) target = $region48
      $region47: #{tpu_custom_call.1} parent=5 // pred_region
        %s255 = ssub.s32 %s17, 1
        %s256 = smul.u32 16, %s22
        %s257 = ssub.s32 38, %s256
        %p258 = scmp.lt.s32.totalorder %s257, 16
        %s259 = scalar_select %p258, %s257, 16
        %s260 = smul.u32 128, %s259
        %p261 = scmp.lt.s32.totalorder %s256, 37
        %s262 = scalar_select %p261, %s256, 37
        %s263 = smul.addr %s262, 8
        %s264 = scalar_lea.vmem %s0, %s263
        %p265 = pneg %p43
        %p266 = pneg %p40
        %p267 = pneg %p64
        %p268 = pneg %p61
        %p269 = pneg %p85
        %p270 = pneg %p82
        %p271 = pneg %p106
        %p272 = pneg %p103
        %p273 = pneg %p127
        %p274 = pneg %p124
        %p275 = pneg %p148
        %p276 = pneg %p145
        %p277 = pneg %p169
        %p278 = pneg %p166
        %p279 = pneg %p195
        %p280 = pneg %p192
        %s281 = sand.u32 %s182, 1
        %s282 = scalar_lea.sflag [#allocation4], %s281
        %s283 = sand.u32 %s182, 1
        %s284 = scalar_lea.vmem [#allocation3], %s283
        %s285 = smul.u32 16, %s22
        %s286 = ssub.s32 38, %s285
        %p287 = scmp.lt.s32.totalorder %s286, 16
        %s288 = scalar_select %p287, %s286, 16
        %s289 = smul.u32 128, %s288
        %p290 = scmp.lt.s32.totalorder %s285, 37
        %s291 = scalar_select %p290, %s285, 37
        %s292 = smul.addr %s291, 8
        %s293 = scalar_lea.vmem %s0, %s292
        %s294 = smul.u32 16, %s22
        %s295 = ssub.s32 38, %s294
        %p296 = scmp.lt.s32.totalorder %s295, 16
        %s297 = scalar_select %p296, %s295, 16
        %s298 = smul.u32 128, %s297
        %v299 = vld [vmem:[%s293] sm:$0xff]
        %v300 = vld [vmem:[%s293 + $0x8] sm:$0xff]
        %v301 = vld [vmem:[%s293 + $0x10] sm:$0xff]
        %v302 = vld [vmem:[%s293 + $0x18] sm:$0xff]
        %v303 = vld [vmem:[%s293 + $0x20] sm:$0xff]
        %v304 = vld [vmem:[%s293 + $0x28] sm:$0xff]
        %v305 = vld [vmem:[%s293 + $0x30] sm:$0xff]
        %v306 = vld [vmem:[%s293 + $0x38] sm:$0xff]
        %v307 = vld [vmem:[%s293 + $0x40] sm:$0xff]
        %v308 = vld [vmem:[%s293 + $0x48] sm:$0xff]
        %v309 = vld [vmem:[%s293 + $0x50] sm:$0xff]
        %v310 = vld [vmem:[%s293 + $0x58] sm:$0xff]
        %v311 = vld [vmem:[%s293 + $0x60] sm:$0xff]
        %v312 = vld [vmem:[%s293 + $0x68] sm:$0xff]
        %v313 = vld [vmem:[%s293 + $0x70] sm:$0xff]
        %v314 = vld [vmem:[%s293 + $0x78] sm:$0xff]
        %v315 = vld [vmem:[%s1] sm:$0xff]
        %v316 = vld [vmem:[%s1 + $0x8] sm:$0x3]
        %v317 = vld [vmem:[%s2] sm:$0xff]
        %v318 = vld [vmem:[%s2 + $0x8] sm:$0x3]
        %320 = vset.pattern.permute.xlu0 0
        %321 = vperm.xlu0 %320, %v317
        %v322 = vpop.permute.xlu0 %321
        %325 = vset.pattern.permute.xlu0 0
        %326 = vperm.xlu0 %325, %v318
        %v327 = vpop.permute.xlu0 %326
        %vm329 = vcmask 64512
        %v331 = vsel %vm329, %v315, 0
        %v334 = vsel %vm329, %v316, 0
        %v337 = vsel %vm329, %v299, 0
        %v340 = vsel %vm329, %v300, 0
        %v343 = vsel %vm329, %v301, 0
        %v346 = vsel %vm329, %v302, 0
        %v349 = vsel %vm329, %v303, 0
        %v352 = vsel %vm329, %v304, 0
        %v355 = vsel %vm329, %v305, 0
        %v358 = vsel %vm329, %v306, 0
        %v361 = vsel %vm329, %v307, 0
        %v364 = vsel %vm329, %v308, 0
        %v367 = vsel %vm329, %v309, 0
        %v370 = vsel %vm329, %v310, 0
        %v373 = vsel %vm329, %v311, 0
        %v376 = vsel %vm329, %v312, 0
        %v379 = vsel %vm329, %v313, 0
        %v382 = vsel %vm329, %v314, 0
        %384 = vmatprep.subr.mxu0 0.0
        %v385 = vand.u32 %v337, 4294901760
        %386 = vmatpush1.xpose.msra.mxu0 %v385
        %387 = vmatprep.subr.mxu0 0.0
        %v388 = vand.u32 %v340, 4294901760
        %389 = vmatpush1.xpose.msra.mxu0 %v388
        %390 = vmatprep.subr.mxu0 0.0
        %v391 = vand.u32 %v343, 4294901760
        %392 = vmatpush1.xpose.msra.mxu0 %v391
        %393 = vmatprep.subr.mxu0 0.0
        %v394 = vand.u32 %v346, 4294901760
        %395 = vmatpush1.xpose.msra.mxu0 %v394
        %396 = vmatprep.subr.mxu0 0.0
        %v397 = vand.u32 %v349, 4294901760
        %398 = vmatpush1.xpose.msra.mxu0 %v397
        %399 = vmatprep.subr.mxu0 0.0
        %v400 = vand.u32 %v352, 4294901760
        %401 = vmatpush1.xpose.msra.mxu0 %v400
        %402 = vmatprep.subr.mxu0 0.0
        %v403 = vand.u32 %v355, 4294901760
        %404 = vmatpush1.xpose.msra.mxu0 %v403
        %405 = vmatprep.subr.mxu0 0.0
        %v406 = vand.u32 %v358, 4294901760
        %407 = vmatpush1.xpose.msra.mxu0 %v406
        %408 = vmatprep.subr.mxu0 0.0
        %v409 = vand.u32 %v361, 4294901760
        %410 = vmatpush1.xpose.msra.mxu0 %v409
        %411 = vmatprep.subr.mxu0 0.0
        %v412 = vand.u32 %v364, 4294901760
        %413 = vmatpush1.xpose.msra.mxu0 %v412
        %414 = vmatprep.subr.mxu0 0.0
        %v415 = vand.u32 %v367, 4294901760
        %416 = vmatpush1.xpose.msra.mxu0 %v415
        %417 = vmatprep.subr.mxu0 0.0
        %v418 = vand.u32 %v370, 4294901760
        %419 = vmatpush1.xpose.msra.mxu0 %v418
        %420 = vmatprep.subr.mxu0 0.0
        %v421 = vand.u32 %v373, 4294901760
        %422 = vmatpush1.xpose.msra.mxu0 %v421
        %423 = vmatprep.subr.mxu0 0.0
        %v424 = vand.u32 %v376, 4294901760
        %425 = vmatpush1.xpose.msra.mxu0 %v424
        %426 = vmatprep.subr.mxu0 0.0
        %v427 = vand.u32 %v379, 4294901760
        %428 = vmatpush1.xpose.msra.mxu0 %v427
        %429 = vmatprep.subr.mxu0 0.0
        %v430 = vand.u32 %v382, 4294901760
        %431 = vmatpush1.xpose.msra.mxu0 %v430
        %432 = vmatprep.subr.mxu0 0.0
        %433 = vmatpush1.xpose.msra.mxu0 0.0
        %434 = vmatprep.subr.mxu0 0.0
        %435 = vmatpush1.xpose.msra.mxu0 0.0
        %436 = vmatprep.subr.mxu0 0.0
        %437 = vmatpush1.xpose.msra.mxu0 0.0
        %438 = vmatprep.subr.mxu0 0.0
        %439 = vmatpush1.xpose.msra.mxu0 0.0
        %440 = vmatprep.subr.mxu0 0.0
        %441 = vmatpush1.xpose.msra.mxu0 0.0
        %442 = vmatprep.subr.mxu0 0.0
        %443 = vmatpush1.xpose.msra.mxu0 0.0
        %444 = vmatprep.subr.mxu0 0.0
        %445 = vmatpush1.xpose.msra.mxu0 0.0
        %446 = vmatprep.subr.mxu0 0.0
        %447 = vmatpush1.xpose.msra.mxu0 0.0
        %448 = vmatprep.subr.mxu0 0.0
        %449 = vmatpush1.xpose.msra.mxu0 0.0
        %450 = vmatprep.subr.mxu0 0.0
        %451 = vmatpush1.xpose.msra.mxu0 0.0
        %452 = vmatprep.subr.mxu0 0.0
        %453 = vmatpush1.xpose.msra.mxu0 0.0
        %454 = vmatprep.subr.mxu0 0.0
        %455 = vmatpush1.xpose.msra.mxu0 0.0
        %456 = vmatprep.subr.mxu0 0.0
        %457 = vmatpush1.xpose.msra.mxu0 0.0
        %458 = vmatprep.subr.mxu0 0.0
        %459 = vmatpush1.xpose.msra.mxu0 0.0
        %460 = vmatprep.subr.mxu0 0.0
        %461 = vmatpush1.xpose.msra.mxu0 0.0
        %462 = vmatprep.subr.mxu0 0.0
        %463 = vmatpush1.xpose.msra.mxu0 0.0
        %464 = vmatprep.mubr.f32.mxu0 0.0
        %v465 = vand.u32 %v331, 4294901760
        %v466 = vsub.f32 %v331, %v465
        %v467 = vand.u32 %v466, 4294901760
        %v468 = vsub.f32 %v466, %v467
        %v469 = vand.u32 %v468, 4294901760
        %470 = vmatmul.mubr.f32.gmra.mrb[0].mxu0 %v469
        %v471 = vpop.f32.mrb[0].mxu0
        %v472 = vadd.f32 %v322, %v471
        %v473 = vpop.f32.mrb[0].mxu0
        %474 = vmatprep.mubr.f32.mxu0 0.0
        %v475 = vand.u32 %v334, 4294901760
        %v476 = vsub.f32 %v334, %v475
        %v477 = vand.u32 %v476, 4294901760
        %v478 = vsub.f32 %v476, %v477
        %v479 = vand.u32 %v478, 4294901760
        %480 = vmatmul.mubr.f32.gmra.mrb[0].mxu0 %v479
        %v481 = vpop.f32.mrb[0].mxu0
        %v482 = vadd.f32 %v327, %v481
        %v483 = vpop.f32.mrb[0].mxu0
        %484 = vdwg.mxu0
        %485 = vmatprep.subr.mxu0 0.0
        %v486 = vand.u32 %v337, 4294901760
        %v487 = vsub.f32 %v337, %v486
        %v488 = vand.u32 %v487, 4294901760
        %v489 = vsub.f32 %v487, %v488
        %v490 = vand.u32 %v489, 4294901760
        %491 = vmatpush1.xpose.msra.mxu0 %v490
        %492 = vmatprep.subr.mxu0 0.0
        %v493 = vand.u32 %v340, 4294901760
        %v494 = vsub.f32 %v340, %v493
        %v495 = vand.u32 %v494, 4294901760
        %v496 = vsub.f32 %v494, %v495
        %v497 = vand.u32 %v496, 4294901760
        %498 = vmatpush1.xpose.msra.mxu0 %v497
        %499 = vmatprep.subr.mxu0 0.0
        %v500 = vand.u32 %v343, 4294901760
        %v501 = vsub.f32 %v343, %v500
        %v502 = vand.u32 %v501, 4294901760
        %v503 = vsub.f32 %v501, %v502
        %v504 = vand.u32 %v503, 4294901760
        %505 = vmatpush1.xpose.msra.mxu0 %v504
        %506 = vmatprep.subr.mxu0 0.0
        %v507 = vand.u32 %v346, 4294901760
        %v508 = vsub.f32 %v346, %v507
        %v509 = vand.u32 %v508, 4294901760
        %v510 = vsub.f32 %v508, %v509
        %v511 = vand.u32 %v510, 4294901760
        %512 = vmatpush1.xpose.msra.mxu0 %v511
        %513 = vmatprep.subr.mxu0 0.0
        %v514 = vand.u32 %v349, 4294901760
        %v515 = vsub.f32 %v349, %v514
        %v516 = vand.u32 %v515, 4294901760
        %v517 = vsub.f32 %v515, %v516
        %v518 = vand.u32 %v517, 4294901760
        %519 = vmatpush1.xpose.msra.mxu0 %v518
        %520 = vmatprep.subr.mxu0 0.0
        %v521 = vand.u32 %v352, 4294901760
        %v522 = vsub.f32 %v352, %v521
        %v523 = vand.u32 %v522, 4294901760
        %v524 = vsub.f32 %v522, %v523
        %v525 = vand.u32 %v524, 4294901760
        %526 = vmatpush1.xpose.msra.mxu0 %v525
        %527 = vmatprep.subr.mxu0 0.0
        %v528 = vand.u32 %v355, 4294901760
        %v529 = vsub.f32 %v355, %v528
        %v530 = vand.u32 %v529, 4294901760
        %v531 = vsub.f32 %v529, %v530
        %v532 = vand.u32 %v531, 4294901760
        %533 = vmatpush1.xpose.msra.mxu0 %v532
        %534 = vmatprep.subr.mxu0 0.0
        %v535 = vand.u32 %v358, 4294901760
        %v536 = vsub.f32 %v358, %v535
        %v537 = vand.u32 %v536, 4294901760
        %v538 = vsub.f32 %v536, %v537
        %v539 = vand.u32 %v538, 4294901760
        %540 = vmatpush1.xpose.msra.mxu0 %v539
        %541 = vmatprep.subr.mxu0 0.0
        %v542 = vand.u32 %v361, 4294901760
        %v543 = vsub.f32 %v361, %v542
        %v544 = vand.u32 %v543, 4294901760
        %v545 = vsub.f32 %v543, %v544
        %v546 = vand.u32 %v545, 4294901760
        %547 = vmatpush1.xpose.msra.mxu0 %v546
        %548 = vmatprep.subr.mxu0 0.0
        %v549 = vand.u32 %v364, 4294901760
        %v550 = vsub.f32 %v364, %v549
        %v551 = vand.u32 %v550, 4294901760
        %v552 = vsub.f32 %v550, %v551
        %v553 = vand.u32 %v552, 4294901760
        %554 = vmatpush1.xpose.msra.mxu0 %v553
        %555 = vmatprep.subr.mxu0 0.0
        %v556 = vand.u32 %v367, 4294901760
        %v557 = vsub.f32 %v367, %v556
        %v558 = vand.u32 %v557, 4294901760
        %v559 = vsub.f32 %v557, %v558
        %v560 = vand.u32 %v559, 4294901760
        %561 = vmatpush1.xpose.msra.mxu0 %v560
        %562 = vmatprep.subr.mxu0 0.0
        %v563 = vand.u32 %v370, 4294901760
        %v564 = vsub.f32 %v370, %v563
        %v565 = vand.u32 %v564, 4294901760
        %v566 = vsub.f32 %v564, %v565
        %v567 = vand.u32 %v566, 4294901760
        %568 = vmatpush1.xpose.msra.mxu0 %v567
        %569 = vmatprep.subr.mxu0 0.0
        %v570 = vand.u32 %v373, 4294901760
        %v571 = vsub.f32 %v373, %v570
        %v572 = vand.u32 %v571, 4294901760
        %v573 = vsub.f32 %v571, %v572
        %v574 = vand.u32 %v573, 4294901760
        %575 = vmatpush1.xpose.msra.mxu0 %v574
        %576 = vmatprep.subr.mxu0 0.0
        %v577 = vand.u32 %v376, 4294901760
        %v578 = vsub.f32 %v376, %v577
        %v579 = vand.u32 %v578, 4294901760
        %v580 = vsub.f32 %v578, %v579
        %v581 = vand.u32 %v580, 4294901760
        %582 = vmatpush1.xpose.msra.mxu0 %v581
        %583 = vmatprep.subr.mxu0 0.0
        %v584 = vand.u32 %v379, 4294901760
        %v585 = vsub.f32 %v379, %v584
        %v586 = vand.u32 %v585, 4294901760
        %v587 = vsub.f32 %v585, %v586
        %v588 = vand.u32 %v587, 4294901760
        %589 = vmatpush1.xpose.msra.mxu0 %v588
        %590 = vmatprep.subr.mxu0 0.0
        %v591 = vand.u32 %v382, 4294901760
        %v592 = vsub.f32 %v382, %v591
        %v593 = vand.u32 %v592, 4294901760
        %v594 = vsub.f32 %v592, %v593
        %v595 = vand.u32 %v594, 4294901760
        %596 = vmatpush1.xpose.msra.mxu0 %v595
        %597 = vmatprep.subr.mxu0 0.0
        %598 = vmatpush1.xpose.msra.mxu0 0.0
        %599 = vmatprep.subr.mxu0 0.0
        %600 = vmatpush1.xpose.msra.mxu0 0.0
        %601 = vmatprep.subr.mxu0 0.0
        %602 = vmatpush1.xpose.msra.mxu0 0.0
        %603 = vmatprep.subr.mxu0 0.0
        %604 = vmatpush1.xpose.msra.mxu0 0.0
        %605 = vmatprep.subr.mxu0 0.0
        %606 = vmatpush1.xpose.msra.mxu0 0.0
        %607 = vmatprep.subr.mxu0 0.0
        %608 = vmatpush1.xpose.msra.mxu0 0.0
        %609 = vmatprep.subr.mxu0 0.0
        %610 = vmatpush1.xpose.msra.mxu0 0.0
        %611 = vmatprep.subr.mxu0 0.0
        %612 = vmatpush1.xpose.msra.mxu0 0.0
        %613 = vmatprep.subr.mxu0 0.0
        %614 = vmatpush1.xpose.msra.mxu0 0.0
        %615 = vmatprep.subr.mxu0 0.0
        %616 = vmatpush1.xpose.msra.mxu0 0.0
        %617 = vmatprep.subr.mxu0 0.0
        %618 = vmatpush1.xpose.msra.mxu0 0.0
        %619 = vmatprep.subr.mxu0 0.0
        %620 = vmatpush1.xpose.msra.mxu0 0.0
        %621 = vmatprep.subr.mxu0 0.0
        %622 = vmatpush1.xpose.msra.mxu0 0.0
        %623 = vmatprep.subr.mxu0 0.0
        %624 = vmatpush1.xpose.msra.mxu0 0.0
        %625 = vmatprep.subr.mxu0 0.0
        %626 = vmatpush1.xpose.msra.mxu0 0.0
        %627 = vmatprep.subr.mxu0 0.0
        %628 = vmatpush1.xpose.msra.mxu0 0.0
        %629 = vmatprep.mubr.f32.mxu0 0.0
        %v630 = vand.u32 %v331, 4294901760
        %631 = vmatmul.mubr.f32.gmra.mrb[0].mxu0 %v630
        %v632 = vpop.f32.mrb[0].mxu0
        %v633 = vadd.f32 %v472, %v632
        %v634 = vpop.f32.mrb[0].mxu0
        %635 = vmatprep.mubr.f32.mxu0 0.0
        %v636 = vand.u32 %v334, 4294901760
        %637 = vmatmul.mubr.f32.gmra.mrb[0].mxu0 %v636
        %v638 = vpop.f32.mrb[0].mxu0
        %v639 = vadd.f32 %v482, %v638
        %v640 = vpop.f32.mrb[0].mxu0
        %641 = vdwg.mxu0
        %642 = vmatprep.subr.mxu0 0.0
        %v643 = vand.u32 %v337, 4294901760
        %v644 = vsub.f32 %v337, %v643
        %645 = vmatpush1.xpose.msra.mxu0 %v644
        %646 = vmatprep.subr.mxu0 0.0
        %v647 = vand.u32 %v340, 4294901760
        %v648 = vsub.f32 %v340, %v647
        %649 = vmatpush1.xpose.msra.mxu0 %v648
        %650 = vmatprep.subr.mxu0 0.0
        %v651 = vand.u32 %v343, 4294901760
        %v652 = vsub.f32 %v343, %v651
        %653 = vmatpush1.xpose.msra.mxu0 %v652
        %654 = vmatprep.subr.mxu0 0.0
        %v655 = vand.u32 %v346, 4294901760
        %v656 = vsub.f32 %v346, %v655
        %657 = vmatpush1.xpose.msra.mxu0 %v656
        %658 = vmatprep.subr.mxu0 0.0
        %v659 = vand.u32 %v349, 4294901760
        %v660 = vsub.f32 %v349, %v659
        %661 = vmatpush1.xpose.msra.mxu0 %v660
        %662 = vmatprep.subr.mxu0 0.0
        %v663 = vand.u32 %v352, 4294901760
        %v664 = vsub.f32 %v352, %v663
        %665 = vmatpush1.xpose.msra.mxu0 %v664
        %666 = vmatprep.subr.mxu0 0.0
        %v667 = vand.u32 %v355, 4294901760
        %v668 = vsub.f32 %v355, %v667
        %669 = vmatpush1.xpose.msra.mxu0 %v668
        %670 = vmatprep.subr.mxu0 0.0
        %v671 = vand.u32 %v358, 4294901760
        %v672 = vsub.f32 %v358, %v671
        %673 = vmatpush1.xpose.msra.mxu0 %v672
        %674 = vmatprep.subr.mxu0 0.0
        %v675 = vand.u32 %v361, 4294901760
        %v676 = vsub.f32 %v361, %v675
        %677 = vmatpush1.xpose.msra.mxu0 %v676
        %678 = vmatprep.subr.mxu0 0.0
        %v679 = vand.u32 %v364, 4294901760
        %v680 = vsub.f32 %v364, %v679
        %681 = vmatpush1.xpose.msra.mxu0 %v680
        %682 = vmatprep.subr.mxu0 0.0
        %v683 = vand.u32 %v367, 4294901760
        %v684 = vsub.f32 %v367, %v683
        %685 = vmatpush1.xpose.msra.mxu0 %v684
        %686 = vmatprep.subr.mxu0 0.0
        %v687 = vand.u32 %v370, 4294901760
        %v688 = vsub.f32 %v370, %v687
        %689 = vmatpush1.xpose.msra.mxu0 %v688
        %690 = vmatprep.subr.mxu0 0.0
        %v691 = vand.u32 %v373, 4294901760
        %v692 = vsub.f32 %v373, %v691
        %693 = vmatpush1.xpose.msra.mxu0 %v692
        %694 = vmatprep.subr.mxu0 0.0
        %v695 = vand.u32 %v376, 4294901760
        %v696 = vsub.f32 %v376, %v695
        %697 = vmatpush1.xpose.msra.mxu0 %v696
        %698 = vmatprep.subr.mxu0 0.0
        %v699 = vand.u32 %v379, 4294901760
        %v700 = vsub.f32 %v379, %v699
        %701 = vmatpush1.xpose.msra.mxu0 %v700
        %702 = vmatprep.subr.mxu0 0.0
        %v703 = vand.u32 %v382, 4294901760
        %v704 = vsub.f32 %v382, %v703
        %705 = vmatpush1.xpose.msra.mxu0 %v704
        %706 = vmatprep.subr.mxu0 0.0
        %707 = vmatpush1.xpose.msra.mxu0 0.0
        %708 = vmatprep.subr.mxu0 0.0
        %709 = vmatpush1.xpose.msra.mxu0 0.0
        %710 = vmatprep.subr.mxu0 0.0
        %711 = vmatpush1.xpose.msra.mxu0 0.0
        %712 = vmatprep.subr.mxu0 0.0
        %713 = vmatpush1.xpose.msra.mxu0 0.0
        %714 = vmatprep.subr.mxu0 0.0
        %715 = vmatpush1.xpose.msra.mxu0 0.0
        %716 = vmatprep.subr.mxu0 0.0
        %717 = vmatpush1.xpose.msra.mxu0 0.0
        %718 = vmatprep.subr.mxu0 0.0
        %719 = vmatpush1.xpose.msra.mxu0 0.0
        %720 = vmatprep.subr.mxu0 0.0
        %721 = vmatpush1.xpose.msra.mxu0 0.0
        %722 = vmatprep.subr.mxu0 0.0
        %723 = vmatpush1.xpose.msra.mxu0 0.0
        %724 = vmatprep.subr.mxu0 0.0
        %725 = vmatpush1.xpose.msra.mxu0 0.0
        %726 = vmatprep.subr.mxu0 0.0
        %727 = vmatpush1.xpose.msra.mxu0 0.0
        %728 = vmatprep.subr.mxu0 0.0
        %729 = vmatpush1.xpose.msra.mxu0 0.0
        %730 = vmatprep.subr.mxu0 0.0
        %731 = vmatpush1.xpose.msra.mxu0 0.0
        %732 = vmatprep.subr.mxu0 0.0
        %733 = vmatpush1.xpose.msra.mxu0 0.0
        %734 = vmatprep.subr.mxu0 0.0
        %735 = vmatpush1.xpose.msra.mxu0 0.0
        %736 = vmatprep.subr.mxu0 0.0
        %737 = vmatpush1.xpose.msra.mxu0 0.0
        %738 = vmatprep.mubr.f32.mxu0 0.0
        %v739 = vand.u32 %v331, 4294901760
        %v740 = vsub.f32 %v331, %v739
        %741 = vmatmul.mubr.f32.gmra.mrb[0].mxu0 %v740
        %v742 = vpop.f32.mrb[0].mxu0
        %v743 = vadd.f32 %v633, %v742
        %v744 = vpop.f32.mrb[0].mxu0
        %745 = vmatprep.mubr.f32.mxu0 0.0
        %v746 = vand.u32 %v334, 4294901760
        %v747 = vsub.f32 %v334, %v746
        %748 = vmatmul.mubr.f32.gmra.mrb[0].mxu0 %v747
        %v749 = vpop.f32.mrb[0].mxu0
        %v750 = vadd.f32 %v639, %v749
        %v751 = vpop.f32.mrb[0].mxu0
        %752 = vdwg.mxu0
        %753 = vmatprep.subr.mxu0 0.0
        %v754 = vand.u32 %v337, 4294901760
        %755 = vmatpush1.xpose.msra.mxu0 %v754
        %756 = vmatprep.subr.mxu0 0.0
        %v757 = vand.u32 %v340, 4294901760
        %758 = vmatpush1.xpose.msra.mxu0 %v757
        %759 = vmatprep.subr.mxu0 0.0
        %v760 = vand.u32 %v343, 4294901760
        %761 = vmatpush1.xpose.msra.mxu0 %v760
        %762 = vmatprep.subr.mxu0 0.0
        %v763 = vand.u32 %v346, 4294901760
        %764 = vmatpush1.xpose.msra.mxu0 %v763
        %765 = vmatprep.subr.mxu0 0.0
        %v766 = vand.u32 %v349, 4294901760
        %767 = vmatpush1.xpose.msra.mxu0 %v766
        %768 = vmatprep.subr.mxu0 0.0
        %v769 = vand.u32 %v352, 4294901760
        %770 = vmatpush1.xpose.msra.mxu0 %v769
        %771 = vmatprep.subr.mxu0 0.0
        %v772 = vand.u32 %v355, 4294901760
        %773 = vmatpush1.xpose.msra.mxu0 %v772
        %774 = vmatprep.subr.mxu0 0.0
        %v775 = vand.u32 %v358, 4294901760
        %776 = vmatpush1.xpose.msra.mxu0 %v775
        %777 = vmatprep.subr.mxu0 0.0
        %v778 = vand.u32 %v361, 4294901760
        %779 = vmatpush1.xpose.msra.mxu0 %v778
        %780 = vmatprep.subr.mxu0 0.0
        %v781 = vand.u32 %v364, 4294901760
        %782 = vmatpush1.xpose.msra.mxu0 %v781
        %783 = vmatprep.subr.mxu0 0.0
        %v784 = vand.u32 %v367, 4294901760
        %785 = vmatpush1.xpose.msra.mxu0 %v784
        %786 = vmatprep.subr.mxu0 0.0
        %v787 = vand.u32 %v370, 4294901760
        %788 = vmatpush1.xpose.msra.mxu0 %v787
        %789 = vmatprep.subr.mxu0 0.0
        %v790 = vand.u32 %v373, 4294901760
        %791 = vmatpush1.xpose.msra.mxu0 %v790
        %792 = vmatprep.subr.mxu0 0.0
        %v793 = vand.u32 %v376, 4294901760
        %794 = vmatpush1.xpose.msra.mxu0 %v793
        %795 = vmatprep.subr.mxu0 0.0
        %v796 = vand.u32 %v379, 4294901760
        %797 = vmatpush1.xpose.msra.mxu0 %v796
        %798 = vmatprep.subr.mxu0 0.0
        %v799 = vand.u32 %v382, 4294901760
        %800 = vmatpush1.xpose.msra.mxu0 %v799
        %801 = vmatprep.subr.mxu0 0.0
        %802 = vmatpush1.xpose.msra.mxu0 0.0
        %803 = vmatprep.subr.mxu0 0.0
        %804 = vmatpush1.xpose.msra.mxu0 0.0
        %805 = vmatprep.subr.mxu0 0.0
        %806 = vmatpush1.xpose.msra.mxu0 0.0
        %807 = vmatprep.subr.mxu0 0.0
        %808 = vmatpush1.xpose.msra.mxu0 0.0
        %809 = vmatprep.subr.mxu0 0.0
        %810 = vmatpush1.xpose.msra.mxu0 0.0
        %811 = vmatprep.subr.mxu0 0.0
        %812 = vmatpush1.xpose.msra.mxu0 0.0
        %813 = vmatprep.subr.mxu0 0.0
        %814 = vmatpush1.xpose.msra.mxu0 0.0
        %815 = vmatprep.subr.mxu0 0.0
        %816 = vmatpush1.xpose.msra.mxu0 0.0
        %817 = vmatprep.subr.mxu0 0.0
        %818 = vmatpush1.xpose.msra.mxu0 0.0
        %819 = vmatprep.subr.mxu0 0.0
        %820 = vmatpush1.xpose.msra.mxu0 0.0
        %821 = vmatprep.subr.mxu0 0.0
        %822 = vmatpush1.xpose.msra.mxu0 0.0
        %823 = vmatprep.subr.mxu0 0.0
        %824 = vmatpush1.xpose.msra.mxu0 0.0
        %825 = vmatprep.subr.mxu0 0.0
        %826 = vmatpush1.xpose.msra.mxu0 0.0
        %827 = vmatprep.subr.mxu0 0.0
        %828 = vmatpush1.xpose.msra.mxu0 0.0
        %829 = vmatprep.subr.mxu0 0.0
        %830 = vmatpush1.xpose.msra.mxu0 0.0
        %831 = vmatprep.subr.mxu0 0.0
        %832 = vmatpush1.xpose.msra.mxu0 0.0
        %833 = vmatprep.mubr.f32.mxu0 0.0
        %v834 = vand.u32 %v331, 4294901760
        %v835 = vsub.f32 %v331, %v834
        %v836 = vand.u32 %v835, 4294901760
        %837 = vmatmul.mubr.f32.gmra.mrb[0].mxu0 %v836
        %v838 = vpop.f32.mrb[0].mxu0
        %v839 = vadd.f32 %v743, %v838
        %v840 = vpop.f32.mrb[0].mxu0
        %841 = vmatprep.mubr.f32.mxu0 0.0
        %v842 = vand.u32 %v334, 4294901760
        %v843 = vsub.f32 %v334, %v842
        %v844 = vand.u32 %v843, 4294901760
        %845 = vmatmul.mubr.f32.gmra.mrb[0].mxu0 %v844
        %v846 = vpop.f32.mrb[0].mxu0
        %v847 = vadd.f32 %v750, %v846
        %v848 = vpop.f32.mrb[0].mxu0
        %849 = vdwg.mxu0
        %850 = vmatprep.subr.mxu0 0.0
        %v851 = vand.u32 %v337, 4294901760
        %v852 = vsub.f32 %v337, %v851
        %v853 = vand.u32 %v852, 4294901760
        %854 = vmatpush1.xpose.msra.mxu0 %v853
        %855 = vmatprep.subr.mxu0 0.0
        %v856 = vand.u32 %v340, 4294901760
        %v857 = vsub.f32 %v340, %v856
        %v858 = vand.u32 %v857, 4294901760
        %859 = vmatpush1.xpose.msra.mxu0 %v858
        %860 = vmatprep.subr.mxu0 0.0
        %v861 = vand.u32 %v343, 4294901760
        %v862 = vsub.f32 %v343, %v861
        %v863 = vand.u32 %v862, 4294901760
        %864 = vmatpush1.xpose.msra.mxu0 %v863
        %865 = vmatprep.subr.mxu0 0.0
        %v866 = vand.u32 %v346, 4294901760
        %v867 = vsub.f32 %v346, %v866
        %v868 = vand.u32 %v867, 4294901760
        %869 = vmatpush1.xpose.msra.mxu0 %v868
        %870 = vmatprep.subr.mxu0 0.0
        %v871 = vand.u32 %v349, 4294901760
        %v872 = vsub.f32 %v349, %v871
        %v873 = vand.u32 %v872, 4294901760
        %874 = vmatpush1.xpose.msra.mxu0 %v873
        %875 = vmatprep.subr.mxu0 0.0
        %v876 = vand.u32 %v352, 4294901760
        %v877 = vsub.f32 %v352, %v876
        %v878 = vand.u32 %v877, 4294901760
        %879 = vmatpush1.xpose.msra.mxu0 %v878
        %880 = vmatprep.subr.mxu0 0.0
        %v881 = vand.u32 %v355, 4294901760
        %v882 = vsub.f32 %v355, %v881
        %v883 = vand.u32 %v882, 4294901760
        %884 = vmatpush1.xpose.msra.mxu0 %v883
        %885 = vmatprep.subr.mxu0 0.0
        %v886 = vand.u32 %v358, 4294901760
        %v887 = vsub.f32 %v358, %v886
        %v888 = vand.u32 %v887, 4294901760
        %889 = vmatpush1.xpose.msra.mxu0 %v888
        %890 = vmatprep.subr.mxu0 0.0
        %v891 = vand.u32 %v361, 4294901760
        %v892 = vsub.f32 %v361, %v891
        %v893 = vand.u32 %v892, 4294901760
        %894 = vmatpush1.xpose.msra.mxu0 %v893
        %895 = vmatprep.subr.mxu0 0.0
        %v896 = vand.u32 %v364, 4294901760
        %v897 = vsub.f32 %v364, %v896
        %v898 = vand.u32 %v897, 4294901760
        %899 = vmatpush1.xpose.msra.mxu0 %v898
        %900 = vmatprep.subr.mxu0 0.0
        %v901 = vand.u32 %v367, 4294901760
        %v902 = vsub.f32 %v367, %v901
        %v903 = vand.u32 %v902, 4294901760
        %904 = vmatpush1.xpose.msra.mxu0 %v903
        %905 = vmatprep.subr.mxu0 0.0
        %v906 = vand.u32 %v370, 4294901760
        %v907 = vsub.f32 %v370, %v906
        %v908 = vand.u32 %v907, 4294901760
        %909 = vmatpush1.xpose.msra.mxu0 %v908
        %910 = vmatprep.subr.mxu0 0.0
        %v911 = vand.u32 %v373, 4294901760
        %v912 = vsub.f32 %v373, %v911
        %v913 = vand.u32 %v912, 4294901760
        %914 = vmatpush1.xpose.msra.mxu0 %v913
        %915 = vmatprep.subr.mxu0 0.0
        %v916 = vand.u32 %v376, 4294901760
        %v917 = vsub.f32 %v376, %v916
        %v918 = vand.u32 %v917, 4294901760
        %919 = vmatpush1.xpose.msra.mxu0 %v918
        %920 = vmatprep.subr.mxu0 0.0
        %v921 = vand.u32 %v379, 4294901760
        %v922 = vsub.f32 %v379, %v921
        %v923 = vand.u32 %v922, 4294901760
        %924 = vmatpush1.xpose.msra.mxu0 %v923
        %925 = vmatprep.subr.mxu0 0.0
        %v926 = vand.u32 %v382, 4294901760
        %v927 = vsub.f32 %v382, %v926
        %v928 = vand.u32 %v927, 4294901760
        %929 = vmatpush1.xpose.msra.mxu0 %v928
        %930 = vmatprep.subr.mxu0 0.0
        %931 = vmatpush1.xpose.msra.mxu0 0.0
        %932 = vmatprep.subr.mxu0 0.0
        %933 = vmatpush1.xpose.msra.mxu0 0.0
        %934 = vmatprep.subr.mxu0 0.0
        %935 = vmatpush1.xpose.msra.mxu0 0.0
        %936 = vmatprep.subr.mxu0 0.0
        %937 = vmatpush1.xpose.msra.mxu0 0.0
        %938 = vmatprep.subr.mxu0 0.0
        %939 = vmatpush1.xpose.msra.mxu0 0.0
        %940 = vmatprep.subr.mxu0 0.0
        %941 = vmatpush1.xpose.msra.mxu0 0.0
        %942 = vmatprep.subr.mxu0 0.0
        %943 = vmatpush1.xpose.msra.mxu0 0.0
        %944 = vmatprep.subr.mxu0 0.0
        %945 = vmatpush1.xpose.msra.mxu0 0.0
        %946 = vmatprep.subr.mxu0 0.0
        %947 = vmatpush1.xpose.msra.mxu0 0.0
        %948 = vmatprep.subr.mxu0 0.0
        %949 = vmatpush1.xpose.msra.mxu0 0.0
        %950 = vmatprep.subr.mxu0 0.0
        %951 = vmatpush1.xpose.msra.mxu0 0.0
        %952 = vmatprep.subr.mxu0 0.0
        %953 = vmatpush1.xpose.msra.mxu0 0.0
        %954 = vmatprep.subr.mxu0 0.0
        %955 = vmatpush1.xpose.msra.mxu0 0.0
        %956 = vmatprep.subr.mxu0 0.0
        %957 = vmatpush1.xpose.msra.mxu0 0.0
        %958 = vmatprep.subr.mxu0 0.0
        %959 = vmatpush1.xpose.msra.mxu0 0.0
        %960 = vmatprep.subr.mxu0 0.0
        %961 = vmatpush1.xpose.msra.mxu0 0.0
        %962 = vmatprep.mubr.f32.mxu0 0.0
        %v963 = vand.u32 %v331, 4294901760
        %964 = vmatmul.mubr.f32.gmra.mrb[0].mxu0 %v963
        %v965 = vpop.f32.mrb[0].mxu0
        %v966 = vadd.f32 %v839, %v965
        %v967 = vpop.f32.mrb[0].mxu0
        %968 = vmatprep.mubr.f32.mxu0 0.0
        %v969 = vand.u32 %v334, 4294901760
        %970 = vmatmul.mubr.f32.gmra.mrb[0].mxu0 %v969
        %v971 = vpop.f32.mrb[0].mxu0
        %v972 = vadd.f32 %v847, %v971
        %v973 = vpop.f32.mrb[0].mxu0
        %974 = vdwg.mxu0
        %975 = vmatprep.subr.mxu0 0.0
        %v976 = vand.u32 %v337, 4294901760
        %977 = vmatpush1.xpose.msra.mxu0 %v976
        %978 = vmatprep.subr.mxu0 0.0
        %v979 = vand.u32 %v340, 4294901760
        %980 = vmatpush1.xpose.msra.mxu0 %v979
        %981 = vmatprep.subr.mxu0 0.0
        %v982 = vand.u32 %v343, 4294901760
        %983 = vmatpush1.xpose.msra.mxu0 %v982
        %984 = vmatprep.subr.mxu0 0.0
        %v985 = vand.u32 %v346, 4294901760
        %986 = vmatpush1.xpose.msra.mxu0 %v985
        %987 = vmatprep.subr.mxu0 0.0
        %v988 = vand.u32 %v349, 4294901760
        %989 = vmatpush1.xpose.msra.mxu0 %v988
        %990 = vmatprep.subr.mxu0 0.0
        %v991 = vand.u32 %v352, 4294901760
        %992 = vmatpush1.xpose.msra.mxu0 %v991
        %993 = vmatprep.subr.mxu0 0.0
        %v994 = vand.u32 %v355, 4294901760
        %995 = vmatpush1.xpose.msra.mxu0 %v994
        %996 = vmatprep.subr.mxu0 0.0
        %v997 = vand.u32 %v358, 4294901760
        %998 = vmatpush1.xpose.msra.mxu0 %v997
        %999 = vmatprep.subr.mxu0 0.0
        %v1000 = vand.u32 %v361, 4294901760
        %1001 = vmatpush1.xpose.msra.mxu0 %v1000
        %1002 = vmatprep.subr.mxu0 0.0
        %v1003 = vand.u32 %v364, 4294901760
        %1004 = vmatpush1.xpose.msra.mxu0 %v1003
        %1005 = vmatprep.subr.mxu0 0.0
        %v1006 = vand.u32 %v367, 4294901760
        %1007 = vmatpush1.xpose.msra.mxu0 %v1006
        %1008 = vmatprep.subr.mxu0 0.0
        %v1009 = vand.u32 %v370, 4294901760
        %1010 = vmatpush1.xpose.msra.mxu0 %v1009
        %1011 = vmatprep.subr.mxu0 0.0
        %v1012 = vand.u32 %v373, 4294901760
        %1013 = vmatpush1.xpose.msra.mxu0 %v1012
        %1014 = vmatprep.subr.mxu0 0.0
        %v1015 = vand.u32 %v376, 4294901760
        %1016 = vmatpush1.xpose.msra.mxu0 %v1015
        %1017 = vmatprep.subr.mxu0 0.0
        %v1018 = vand.u32 %v379, 4294901760
        %1019 = vmatpush1.xpose.msra.mxu0 %v1018
        %1020 = vmatprep.subr.mxu0 0.0
        %v1021 = vand.u32 %v382, 4294901760
        %1022 = vmatpush1.xpose.msra.mxu0 %v1021
        %1023 = vmatprep.subr.mxu0 0.0
        %1024 = vmatpush1.xpose.msra.mxu0 0.0
        %1025 = vmatprep.subr.mxu0 0.0
        %1026 = vmatpush1.xpose.msra.mxu0 0.0
        %1027 = vmatprep.subr.mxu0 0.0
        %1028 = vmatpush1.xpose.msra.mxu0 0.0
        %1029 = vmatprep.subr.mxu0 0.0
        %1030 = vmatpush1.xpose.msra.mxu0 0.0
        %1031 = vmatprep.subr.mxu0 0.0
        %1032 = vmatpush1.xpose.msra.mxu0 0.0
        %1033 = vmatprep.subr.mxu0 0.0
        %1034 = vmatpush1.xpose.msra.mxu0 0.0
        %1035 = vmatprep.subr.mxu0 0.0
        %1036 = vmatpush1.xpose.msra.mxu0 0.0
        %1037 = vmatprep.subr.mxu0 0.0
        %1038 = vmatpush1.xpose.msra.mxu0 0.0
        %1039 = vmatprep.subr.mxu0 0.0
        %1040 = vmatpush1.xpose.msra.mxu0 0.0
        %1041 = vmatprep.subr.mxu0 0.0
        %1042 = vmatpush1.xpose.msra.mxu0 0.0
        %1043 = vmatprep.subr.mxu0 0.0
        %1044 = vmatpush1.xpose.msra.mxu0 0.0
        %1045 = vmatprep.subr.mxu0 0.0
        %1046 = vmatpush1.xpose.msra.mxu0 0.0
        %1047 = vmatprep.subr.mxu0 0.0
        %1048 = vmatpush1.xpose.msra.mxu0 0.0
        %1049 = vmatprep.subr.mxu0 0.0
        %1050 = vmatpush1.xpose.msra.mxu0 0.0
        %1051 = vmatprep.subr.mxu0 0.0
        %1052 = vmatpush1.xpose.msra.mxu0 0.0
        %1053 = vmatprep.subr.mxu0 0.0
        %1054 = vmatpush1.xpose.msra.mxu0 0.0
        %1055 = vmatprep.mubr.f32.mxu0 0.0
        %v1056 = vand.u32 %v331, 4294901760
        %1057 = vmatmul.mubr.f32.gmra.mrb[0].mxu0 %v1056
        %v1058 = vpop.f32.mrb[0].mxu0
        %v1059 = vadd.f32 %v966, %v1058
        %v1060 = vpop.f32.mrb[0].mxu0
        %1061 = vmatprep.mubr.f32.mxu0 0.0
        %v1062 = vand.u32 %v334, 4294901760
        %1063 = vmatmul.mubr.f32.gmra.mrb[0].mxu0 %v1062
        %v1064 = vpop.f32.mrb[0].mxu0
        %v1065 = vadd.f32 %v972, %v1064
        %v1066 = vpop.f32.mrb[0].mxu0
        %1067 = vdwg.mxu0
        %v1068 = vmax.f32 %v1059, 0.0
        %v1069 = vmax.f32 %v1065, 0.0
        %v1070 = vld [vmem:[%s3] sm:$0xff]
        %v1071 = vld [vmem:[%s3 + $0x8] sm:$0x7f]
        %v1072 = vld [vmem:[%s4] sm:$0xff]
        %v1073 = vld [vmem:[%s4 + $0x8] sm:$0x7f]
        %1075 = vset.pattern.permute.xlu0 0
        %1076 = vperm.xlu0 %1075, %v1072
        %v1077 = vpop.permute.xlu0 %1076
        %1080 = vset.pattern.permute.xlu0 0
        %1081 = vperm.xlu0 %1080, %v1073
        %v1082 = vpop.permute.xlu0 %1081
        %vm1084 = vcmask 80896
        %v1086 = vsel %vm1084, %v1070, 0
        %v1089 = vsel %vm1084, %v1071, 0
        %vm1091 = vcmask 1041408
        %v1093 = vsel %vm1091, %v1069, 0
        %1095 = vmatprep.subr.mxu0 0.0
        %v1096 = vand.u32 %v1068, 4294901760
        %1097 = vmatpush1.msra.mxu0 %v1096
        %1098 = vmatprep.subr.mxu0 0.0
        %v1099 = vand.u32 %v1093, 4294901760
        %1100 = vmatpush1.msra.mxu0 %v1099
        %1101 = vmatprep.subr.mxu0 0.0
        %1102 = vmatpush1.msra.mxu0 0.0
        %1103 = vmatprep.subr.mxu0 0.0
        %1104 = vmatpush1.msra.mxu0 0.0
        %1105 = vmatprep.subr.mxu0 0.0
        %1106 = vmatpush1.msra.mxu0 0.0
        %1107 = vmatprep.subr.mxu0 0.0
        %1108 = vmatpush1.msra.mxu0 0.0
        %1109 = vmatprep.subr.mxu0 0.0
        %1110 = vmatpush1.msra.mxu0 0.0
        %1111 = vmatprep.subr.mxu0 0.0
        %1112 = vmatpush1.msra.mxu0 0.0
        %1113 = vmatprep.subr.mxu0 0.0
        %1114 = vmatpush1.msra.mxu0 0.0
        %1115 = vmatprep.subr.mxu0 0.0
        %1116 = vmatpush1.msra.mxu0 0.0
        %1117 = vmatprep.subr.mxu0 0.0
        %1118 = vmatpush1.msra.mxu0 0.0
        %1119 = vmatprep.subr.mxu0 0.0
        %1120 = vmatpush1.msra.mxu0 0.0
        %1121 = vmatprep.subr.mxu0 0.0
        %1122 = vmatpush1.msra.mxu0 0.0
        %1123 = vmatprep.subr.mxu0 0.0
        %1124 = vmatpush1.msra.mxu0 0.0
        %1125 = vmatprep.subr.mxu0 0.0
        %1126 = vmatpush1.msra.mxu0 0.0
        %1127 = vmatprep.subr.mxu0 0.0
        %1128 = vmatpush1.msra.mxu0 0.0
        %1129 = vmatprep.subr.mxu0 0.0
        %1130 = vmatpush1.msra.mxu0 0.0
        %1131 = vmatprep.subr.mxu0 0.0
        %1132 = vmatpush1.msra.mxu0 0.0
        %1133 = vmatprep.subr.mxu0 0.0
        %1134 = vmatpush1.msra.mxu0 0.0
        %1135 = vmatprep.subr.mxu0 0.0
        %1136 = vmatpush1.msra.mxu0 0.0
        %1137 = vmatprep.subr.mxu0 0.0
        %1138 = vmatpush1.msra.mxu0 0.0
        %1139 = vmatprep.subr.mxu0 0.0
        %1140 = vmatpush1.msra.mxu0 0.0
        %1141 = vmatprep.subr.mxu0 0.0
        %1142 = vmatpush1.msra.mxu0 0.0
        %1143 = vmatprep.subr.mxu0 0.0
        %1144 = vmatpush1.msra.mxu0 0.0
        %1145 = vmatprep.subr.mxu0 0.0
        %1146 = vmatpush1.msra.mxu0 0.0
        %1147 = vmatprep.subr.mxu0 0.0
        %1148 = vmatpush1.msra.mxu0 0.0
        %1149 = vmatprep.subr.mxu0 0.0
        %1150 = vmatpush1.msra.mxu0 0.0
        %1151 = vmatprep.subr.mxu0 0.0
        %1152 = vmatpush1.msra.mxu0 0.0
        %1153 = vmatprep.subr.mxu0 0.0
        %1154 = vmatpush1.msra.mxu0 0.0
        %1155 = vmatprep.subr.mxu0 0.0
        %1156 = vmatpush1.msra.mxu0 0.0
        %1157 = vmatprep.subr.mxu0 0.0
        %1158 = vmatpush1.msra.mxu0 0.0
        %1159 = vmatprep.subr.mxu0 0.0
        %1160 = vmatpush1.msra.mxu0 0.0
        %1161 = vmatprep.mubr.f32.mxu0 0.0
        %v1162 = vand.u32 %v1086, 4294901760
        %v1163 = vsub.f32 %v1086, %v1162
        %v1164 = vand.u32 %v1163, 4294901760
        %v1165 = vsub.f32 %v1163, %v1164
        %v1166 = vand.u32 %v1165, 4294901760
        %1167 = vmatmul.mubr.f32.gmra.mrb[0].mxu0 %v1166
        %v1168 = vpop.f32.mrb[0].mxu0
        %v1169 = vadd.f32 %v1077, %v1168
        %v1170 = vpop.f32.mrb[0].mxu0
        %1171 = vmatprep.mubr.f32.mxu0 0.0
        %v1172 = vand.u32 %v1089, 4294901760
        %v1173 = vsub.f32 %v1089, %v1172
        %v1174 = vand.u32 %v1173, 4294901760
        %v1175 = vsub.f32 %v1173, %v1174
        %v1176 = vand.u32 %v1175, 4294901760
        %1177 = vmatmul.mubr.f32.gmra.mrb[0].mxu0 %v1176
        %v1178 = vpop.f32.mrb[0].mxu0
        %v1179 = vadd.f32 %v1082, %v1178
        %v1180 = vpop.f32.mrb[0].mxu0
        %1181 = vdwg.mxu0
        %1182 = vmatprep.subr.mxu0 0.0
        %v1183 = vand.u32 %v1068, 4294901760
        %v1184 = vsub.f32 %v1068, %v1183
        %v1185 = vand.u32 %v1184, 4294901760
        %v1186 = vsub.f32 %v1184, %v1185
        %v1187 = vand.u32 %v1186, 4294901760
        %1188 = vmatpush1.msra.mxu0 %v1187
        %1189 = vmatprep.subr.mxu0 0.0
        %v1190 = vand.u32 %v1093, 4294901760
        %v1191 = vsub.f32 %v1093, %v1190
        %v1192 = vand.u32 %v1191, 4294901760
        %v1193 = vsub.f32 %v1191, %v1192
        %v1194 = vand.u32 %v1193, 4294901760
        %1195 = vmatpush1.msra.mxu0 %v1194
        %1196 = vmatprep.subr.mxu0 0.0
        %1197 = vmatpush1.msra.mxu0 0.0
        %1198 = vmatprep.subr.mxu0 0.0
        %1199 = vmatpush1.msra.mxu0 0.0
        %1200 = vmatprep.subr.mxu0 0.0
        %1201 = vmatpush1.msra.mxu0 0.0
        %1202 = vmatprep.subr.mxu0 0.0
        %1203 = vmatpush1.msra.mxu0 0.0
        %1204 = vmatprep.subr.mxu0 0.0
        %1205 = vmatpush1.msra.mxu0 0.0
        %1206 = vmatprep.subr.mxu0 0.0
        %1207 = vmatpush1.msra.mxu0 0.0
        %1208 = vmatprep.subr.mxu0 0.0
        %1209 = vmatpush1.msra.mxu0 0.0
        %1210 = vmatprep.subr.mxu0 0.0
        %1211 = vmatpush1.msra.mxu0 0.0
        %1212 = vmatprep.subr.mxu0 0.0
        %1213 = vmatpush1.msra.mxu0 0.0
        %1214 = vmatprep.subr.mxu0 0.0
        %1215 = vmatpush1.msra.mxu0 0.0
        %1216 = vmatprep.subr.mxu0 0.0
        %1217 = vmatpush1.msra.mxu0 0.0
        %1218 = vmatprep.subr.mxu0 0.0
        %1219 = vmatpush1.msra.mxu0 0.0
        %1220 = vmatprep.subr.mxu0 0.0
        %1221 = vmatpush1.msra.mxu0 0.0
        %1222 = vmatprep.subr.mxu0 0.0
        %1223 = vmatpush1.msra.mxu0 0.0
        %1224 = vmatprep.subr.mxu0 0.0
        %1225 = vmatpush1.msra.mxu0 0.0
        %1226 = vmatprep.subr.mxu0 0.0
        %1227 = vmatpush1.msra.mxu0 0.0
        %1228 = vmatprep.subr.mxu0 0.0
        %1229 = vmatpush1.msra.mxu0 0.0
        %1230 = vmatprep.subr.mxu0 0.0
        %1231 = vmatpush1.msra.mxu0 0.0
        %1232 = vmatprep.subr.mxu0 0.0
        %1233 = vmatpush1.msra.mxu0 0.0
        %1234 = vmatprep.subr.mxu0 0.0
        %1235 = vmatpush1.msra.mxu0 0.0
        %1236 = vmatprep.subr.mxu0 0.0
        %1237 = vmatpush1.msra.mxu0 0.0
        %1238 = vmatprep.subr.mxu0 0.0
        %1239 = vmatpush1.msra.mxu0 0.0
        %1240 = vmatprep.subr.mxu0 0.0
        %1241 = vmatpush1.msra.mxu0 0.0
        %1242 = vmatprep.subr.mxu0 0.0
        %1243 = vmatpush1.msra.mxu0 0.0
        %1244 = vmatprep.subr.mxu0 0.0
        %1245 = vmatpush1.msra.mxu0 0.0
        %1246 = vmatprep.subr.mxu0 0.0
        %1247 = vmatpush1.msra.mxu0 0.0
        %1248 = vmatprep.subr.mxu0 0.0
        %1249 = vmatpush1.msra.mxu0 0.0
        %1250 = vmatprep.subr.mxu0 0.0
        %1251 = vmatpush1.msra.mxu0 0.0
        %1252 = vmatprep.subr.mxu0 0.0
        %1253 = vmatpush1.msra.mxu0 0.0
        %1254 = vmatprep.subr.mxu0 0.0
        %1255 = vmatpush1.msra.mxu0 0.0
        %1256 = vmatprep.mubr.f32.mxu0 0.0
        %v1257 = vand.u32 %v1086, 4294901760
        %1258 = vmatmul.mubr.f32.gmra.mrb[0].mxu0 %v1257
        %v1259 = vpop.f32.mrb[0].mxu0
        %v1260 = vadd.f32 %v1169, %v1259
        %v1261 = vpop.f32.mrb[0].mxu0
        %1262 = vmatprep.mubr.f32.mxu0 0.0
        %v1263 = vand.u32 %v1089, 4294901760
        %1264 = vmatmul.mubr.f32.gmra.mrb[0].mxu0 %v1263
        %v1265 = vpop.f32.mrb[0].mxu0
        %v1266 = vadd.f32 %v1179, %v1265
        %v1267 = vpop.f32.mrb[0].mxu0
        %1268 = vdwg.mxu0
        %1269 = vmatprep.subr.mxu0 0.0
        %v1270 = vand.u32 %v1068, 4294901760
        %v1271 = vsub.f32 %v1068, %v1270
        %1272 = vmatpush1.msra.mxu0 %v1271
        %1273 = vmatprep.subr.mxu0 0.0
        %v1274 = vand.u32 %v1093, 4294901760
        %v1275 = vsub.f32 %v1093, %v1274
        %1276 = vmatpush1.msra.mxu0 %v1275
        %1277 = vmatprep.subr.mxu0 0.0
        %1278 = vmatpush1.msra.mxu0 0.0
        %1279 = vmatprep.subr.mxu0 0.0
        %1280 = vmatpush1.msra.mxu0 0.0
        %1281 = vmatprep.subr.mxu0 0.0
        %1282 = vmatpush1.msra.mxu0 0.0
        %1283 = vmatprep.subr.mxu0 0.0
        %1284 = vmatpush1.msra.mxu0 0.0
        %1285 = vmatprep.subr.mxu0 0.0
        %1286 = vmatpush1.msra.mxu0 0.0
        %1287 = vmatprep.subr.mxu0 0.0
        %1288 = vmatpush1.msra.mxu0 0.0
        %1289 = vmatprep.subr.mxu0 0.0
        %1290 = vmatpush1.msra.mxu0 0.0
        %1291 = vmatprep.subr.mxu0 0.0
        %1292 = vmatpush1.msra.mxu0 0.0
        %1293 = vmatprep.subr.mxu0 0.0
        %1294 = vmatpush1.msra.mxu0 0.0
        %1295 = vmatprep.subr.mxu0 0.0
        %1296 = vmatpush1.msra.mxu0 0.0
        %1297 = vmatprep.subr.mxu0 0.0
        %1298 = vmatpush1.msra.mxu0 0.0
        %1299 = vmatprep.subr.mxu0 0.0
        %1300 = vmatpush1.msra.mxu0 0.0
        %1301 = vmatprep.subr.mxu0 0.0
        %1302 = vmatpush1.msra.mxu0 0.0
        %1303 = vmatprep.subr.mxu0 0.0
        %1304 = vmatpush1.msra.mxu0 0.0
        %1305 = vmatprep.subr.mxu0 0.0
        %1306 = vmatpush1.msra.mxu0 0.0
        %1307 = vmatprep.subr.mxu0 0.0
        %1308 = vmatpush1.msra.mxu0 0.0
        %1309 = vmatprep.subr.mxu0 0.0
        %1310 = vmatpush1.msra.mxu0 0.0
        %1311 = vmatprep.subr.mxu0 0.0
        %1312 = vmatpush1.msra.mxu0 0.0
        %1313 = vmatprep.subr.mxu0 0.0
        %1314 = vmatpush1.msra.mxu0 0.0
        %1315 = vmatprep.subr.mxu0 0.0
        %1316 = vmatpush1.msra.mxu0 0.0
        %1317 = vmatprep.subr.mxu0 0.0
        %1318 = vmatpush1.msra.mxu0 0.0
        %1319 = vmatprep.subr.mxu0 0.0
        %1320 = vmatpush1.msra.mxu0 0.0
        %1321 = vmatprep.subr.mxu0 0.0
        %1322 = vmatpush1.msra.mxu0 0.0
        %1323 = vmatprep.subr.mxu0 0.0
        %1324 = vmatpush1.msra.mxu0 0.0
        %1325 = vmatprep.subr.mxu0 0.0
        %1326 = vmatpush1.msra.mxu0 0.0
        %1327 = vmatprep.subr.mxu0 0.0
        %1328 = vmatpush1.msra.mxu0 0.0
        %1329 = vmatprep.subr.mxu0 0.0
        %1330 = vmatpush1.msra.mxu0 0.0
        %1331 = vmatprep.subr.mxu0 0.0
        %1332 = vmatpush1.msra.mxu0 0.0
        %1333 = vmatprep.subr.mxu0 0.0
        %1334 = vmatpush1.msra.mxu0 0.0
        %1335 = vmatprep.subr.mxu0 0.0
        %1336 = vmatpush1.msra.mxu0 0.0
        %1337 = vmatprep.mubr.f32.mxu0 0.0
        %v1338 = vand.u32 %v1086, 4294901760
        %v1339 = vsub.f32 %v1086, %v1338
        %1340 = vmatmul.mubr.f32.gmra.mrb[0].mxu0 %v1339
        %v1341 = vpop.f32.mrb[0].mxu0
        %v1342 = vadd.f32 %v1260, %v1341
        %v1343 = vpop.f32.mrb[0].mxu0
        %1344 = vmatprep.mubr.f32.mxu0 0.0
        %v1345 = vand.u32 %v1089, 4294901760
        %v1346 = vsub.f32 %v1089, %v1345
        %1347 = vmatmul.mubr.f32.gmra.mrb[0].mxu0 %v1346
        %v1348 = vpop.f32.mrb[0].mxu0
        %v1349 = vadd.f32 %v1266, %v1348
        %v1350 = vpop.f32.mrb[0].mxu0
        %1351 = vdwg.mxu0
        %1352 = vmatprep.subr.mxu0 0.0
        %v1353 = vand.u32 %v1068, 4294901760
        %1354 = vmatpush1.msra.mxu0 %v1353
        %1355 = vmatprep.subr.mxu0 0.0
        %v1356 = vand.u32 %v1093, 4294901760
        %1357 = vmatpush1.msra.mxu0 %v1356
        %1358 = vmatprep.subr.mxu0 0.0
        %1359 = vmatpush1.msra.mxu0 0.0
        %1360 = vmatprep.subr.mxu0 0.0
        %1361 = vmatpush1.msra.mxu0 0.0
        %1362 = vmatprep.subr.mxu0 0.0
        %1363 = vmatpush1.msra.mxu0 0.0
        %1364 = vmatprep.subr.mxu0 0.0
        %1365 = vmatpush1.msra.mxu0 0.0
        %1366 = vmatprep.subr.mxu0 0.0
        %1367 = vmatpush1.msra.mxu0 0.0
        %1368 = vmatprep.subr.mxu0 0.0
        %1369 = vmatpush1.msra.mxu0 0.0
        %1370 = vmatprep.subr.mxu0 0.0
        %1371 = vmatpush1.msra.mxu0 0.0
        %1372 = vmatprep.subr.mxu0 0.0
        %1373 = vmatpush1.msra.mxu0 0.0
        %1374 = vmatprep.subr.mxu0 0.0
        %1375 = vmatpush1.msra.mxu0 0.0
        %1376 = vmatprep.subr.mxu0 0.0
        %1377 = vmatpush1.msra.mxu0 0.0
        %1378 = vmatprep.subr.mxu0 0.0
        %1379 = vmatpush1.msra.mxu0 0.0
        %1380 = vmatprep.subr.mxu0 0.0
        %1381 = vmatpush1.msra.mxu0 0.0
        %1382 = vmatprep.subr.mxu0 0.0
        %1383 = vmatpush1.msra.mxu0 0.0
        %1384 = vmatprep.subr.mxu0 0.0
        %1385 = vmatpush1.msra.mxu0 0.0
        %1386 = vmatprep.subr.mxu0 0.0
        %1387 = vmatpush1.msra.mxu0 0.0
        %1388 = vmatprep.subr.mxu0 0.0
        %1389 = vmatpush1.msra.mxu0 0.0
        %1390 = vmatprep.subr.mxu0 0.0
        %1391 = vmatpush1.msra.mxu0 0.0
        %1392 = vmatprep.subr.mxu0 0.0
        %1393 = vmatpush1.msra.mxu0 0.0
        %1394 = vmatprep.subr.mxu0 0.0
        %1395 = vmatpush1.msra.mxu0 0.0
        %1396 = vmatprep.subr.mxu0 0.0
        %1397 = vmatpush1.msra.mxu0 0.0
        %1398 = vmatprep.subr.mxu0 0.0
        %1399 = vmatpush1.msra.mxu0 0.0
        %1400 = vmatprep.subr.mxu0 0.0
        %1401 = vmatpush1.msra.mxu0 0.0
        %1402 = vmatprep.subr.mxu0 0.0
        %1403 = vmatpush1.msra.mxu0 0.0
        %1404 = vmatprep.subr.mxu0 0.0
        %1405 = vmatpush1.msra.mxu0 0.0
        %1406 = vmatprep.subr.mxu0 0.0
        %1407 = vmatpush1.msra.mxu0 0.0
        %1408 = vmatprep.subr.mxu0 0.0
        %1409 = vmatpush1.msra.mxu0 0.0
        %1410 = vmatprep.subr.mxu0 0.0
        %1411 = vmatpush1.msra.mxu0 0.0
        %1412 = vmatprep.subr.mxu0 0.0
        %1413 = vmatpush1.msra.mxu0 0.0
        %1414 = vmatprep.subr.mxu0 0.0
        %1415 = vmatpush1.msra.mxu0 0.0
        %1416 = vmatprep.subr.mxu0 0.0
        %1417 = vmatpush1.msra.mxu0 0.0
        %1418 = vmatprep.mubr.f32.mxu0 0.0
        %v1419 = vand.u32 %v1086, 4294901760
        %v1420 = vsub.f32 %v1086, %v1419
        %v1421 = vand.u32 %v1420, 4294901760
        %1422 = vmatmul.mubr.f32.gmra.mrb[0].mxu0 %v1421
        %v1423 = vpop.f32.mrb[0].mxu0
        %v1424 = vadd.f32 %v1342, %v1423
        %v1425 = vpop.f32.mrb[0].mxu0
        %1426 = vmatprep.mubr.f32.mxu0 0.0
        %v1427 = vand.u32 %v1089, 4294901760
        %v1428 = vsub.f32 %v1089, %v1427
        %v1429 = vand.u32 %v1428, 4294901760
        %1430 = vmatmul.mubr.f32.gmra.mrb[0].mxu0 %v1429
        %v1431 = vpop.f32.mrb[0].mxu0
        %v1432 = vadd.f32 %v1349, %v1431
        %v1433 = vpop.f32.mrb[0].mxu0
        %1434 = vdwg.mxu0
        %1435 = vmatprep.subr.mxu0 0.0
        %v1436 = vand.u32 %v1068, 4294901760
        %v1437 = vsub.f32 %v1068, %v1436
        %v1438 = vand.u32 %v1437, 4294901760
        %1439 = vmatpush1.msra.mxu0 %v1438
        %1440 = vmatprep.subr.mxu0 0.0
        %v1441 = vand.u32 %v1093, 4294901760
        %v1442 = vsub.f32 %v1093, %v1441
        %v1443 = vand.u32 %v1442, 4294901760
        %1444 = vmatpush1.msra.mxu0 %v1443
        %1445 = vmatprep.subr.mxu0 0.0
        %1446 = vmatpush1.msra.mxu0 0.0
        %1447 = vmatprep.subr.mxu0 0.0
        %1448 = vmatpush1.msra.mxu0 0.0
        %1449 = vmatprep.subr.mxu0 0.0
        %1450 = vmatpush1.msra.mxu0 0.0
        %1451 = vmatprep.subr.mxu0 0.0
        %1452 = vmatpush1.msra.mxu0 0.0
        %1453 = vmatprep.subr.mxu0 0.0
        %1454 = vmatpush1.msra.mxu0 0.0
        %1455 = vmatprep.subr.mxu0 0.0
        %1456 = vmatpush1.msra.mxu0 0.0
        %1457 = vmatprep.subr.mxu0 0.0
        %1458 = vmatpush1.msra.mxu0 0.0
        %1459 = vmatprep.subr.mxu0 0.0
        %1460 = vmatpush1.msra.mxu0 0.0
        %1461 = vmatprep.subr.mxu0 0.0
        %1462 = vmatpush1.msra.mxu0 0.0
        %1463 = vmatprep.subr.mxu0 0.0
        %1464 = vmatpush1.msra.mxu0 0.0
        %1465 = vmatprep.subr.mxu0 0.0
        %1466 = vmatpush1.msra.mxu0 0.0
        %1467 = vmatprep.subr.mxu0 0.0
        %1468 = vmatpush1.msra.mxu0 0.0
        %1469 = vmatprep.subr.mxu0 0.0
        %1470 = vmatpush1.msra.mxu0 0.0
        %1471 = vmatprep.subr.mxu0 0.0
        %1472 = vmatpush1.msra.mxu0 0.0
        %1473 = vmatprep.subr.mxu0 0.0
        %1474 = vmatpush1.msra.mxu0 0.0
        %1475 = vmatprep.subr.mxu0 0.0
        %1476 = vmatpush1.msra.mxu0 0.0
        %1477 = vmatprep.subr.mxu0 0.0
        %1478 = vmatpush1.msra.mxu0 0.0
        %1479 = vmatprep.subr.mxu0 0.0
        %1480 = vmatpush1.msra.mxu0 0.0
        %1481 = vmatprep.subr.mxu0 0.0
        %1482 = vmatpush1.msra.mxu0 0.0
        %1483 = vmatprep.subr.mxu0 0.0
        %1484 = vmatpush1.msra.mxu0 0.0
        %1485 = vmatprep.subr.mxu0 0.0
        %1486 = vmatpush1.msra.mxu0 0.0
        %1487 = vmatprep.subr.mxu0 0.0
        %1488 = vmatpush1.msra.mxu0 0.0
        %1489 = vmatprep.subr.mxu0 0.0
        %1490 = vmatpush1.msra.mxu0 0.0
        %1491 = vmatprep.subr.mxu0 0.0
        %1492 = vmatpush1.msra.mxu0 0.0
        %1493 = vmatprep.subr.mxu0 0.0
        %1494 = vmatpush1.msra.mxu0 0.0
        %1495 = vmatprep.subr.mxu0 0.0
        %1496 = vmatpush1.msra.mxu0 0.0
        %1497 = vmatprep.subr.mxu0 0.0
        %1498 = vmatpush1.msra.mxu0 0.0
        %1499 = vmatprep.subr.mxu0 0.0
        %1500 = vmatpush1.msra.mxu0 0.0
        %1501 = vmatprep.subr.mxu0 0.0
        %1502 = vmatpush1.msra.mxu0 0.0
        %1503 = vmatprep.subr.mxu0 0.0
        %1504 = vmatpush1.msra.mxu0 0.0
        %1505 = vmatprep.mubr.f32.mxu0 0.0
        %v1506 = vand.u32 %v1086, 4294901760
        %1507 = vmatmul.mubr.f32.gmra.mrb[0].mxu0 %v1506
        %v1508 = vpop.f32.mrb[0].mxu0
        %v1509 = vadd.f32 %v1424, %v1508
        %v1510 = vpop.f32.mrb[0].mxu0
        %1511 = vmatprep.mubr.f32.mxu0 0.0
        %v1512 = vand.u32 %v1089, 4294901760
        %1513 = vmatmul.mubr.f32.gmra.mrb[0].mxu0 %v1512
        %v1514 = vpop.f32.mrb[0].mxu0
        %v1515 = vadd.f32 %v1432, %v1514
        %v1516 = vpop.f32.mrb[0].mxu0
        %1517 = vdwg.mxu0
        %1518 = vmatprep.subr.mxu0 0.0
        %v1519 = vand.u32 %v1068, 4294901760
        %1520 = vmatpush1.msra.mxu0 %v1519
        %1521 = vmatprep.subr.mxu0 0.0
        %v1522 = vand.u32 %v1093, 4294901760
        %1523 = vmatpush1.msra.mxu0 %v1522
        %1524 = vmatprep.subr.mxu0 0.0
        %1525 = vmatpush1.msra.mxu0 0.0
        %1526 = vmatprep.subr.mxu0 0.0
        %1527 = vmatpush1.msra.mxu0 0.0
        %1528 = vmatprep.subr.mxu0 0.0
        %1529 = vmatpush1.msra.mxu0 0.0
        %1530 = vmatprep.subr.mxu0 0.0
        %1531 = vmatpush1.msra.mxu0 0.0
        %1532 = vmatprep.subr.mxu0 0.0
        %1533 = vmatpush1.msra.mxu0 0.0
        %1534 = vmatprep.subr.mxu0 0.0
        %1535 = vmatpush1.msra.mxu0 0.0
        %1536 = vmatprep.subr.mxu0 0.0
        %1537 = vmatpush1.msra.mxu0 0.0
        %1538 = vmatprep.subr.mxu0 0.0
        %1539 = vmatpush1.msra.mxu0 0.0
        %1540 = vmatprep.subr.mxu0 0.0
        %1541 = vmatpush1.msra.mxu0 0.0
        %1542 = vmatprep.subr.mxu0 0.0
        %1543 = vmatpush1.msra.mxu0 0.0
        %1544 = vmatprep.subr.mxu0 0.0
        %1545 = vmatpush1.msra.mxu0 0.0
        %1546 = vmatprep.subr.mxu0 0.0
        %1547 = vmatpush1.msra.mxu0 0.0
        %1548 = vmatprep.subr.mxu0 0.0
        %1549 = vmatpush1.msra.mxu0 0.0
        %1550 = vmatprep.subr.mxu0 0.0
        %1551 = vmatpush1.msra.mxu0 0.0
        %1552 = vmatprep.subr.mxu0 0.0
        %1553 = vmatpush1.msra.mxu0 0.0
        %1554 = vmatprep.subr.mxu0 0.0
        %1555 = vmatpush1.msra.mxu0 0.0
        %1556 = vmatprep.subr.mxu0 0.0
        %1557 = vmatpush1.msra.mxu0 0.0
        %1558 = vmatprep.subr.mxu0 0.0
        %1559 = vmatpush1.msra.mxu0 0.0
        %1560 = vmatprep.subr.mxu0 0.0
        %1561 = vmatpush1.msra.mxu0 0.0
        %1562 = vmatprep.subr.mxu0 0.0
        %1563 = vmatpush1.msra.mxu0 0.0
        %1564 = vmatprep.subr.mxu0 0.0
        %1565 = vmatpush1.msra.mxu0 0.0
        %1566 = vmatprep.subr.mxu0 0.0
        %1567 = vmatpush1.msra.mxu0 0.0
        %1568 = vmatprep.subr.mxu0 0.0
        %1569 = vmatpush1.msra.mxu0 0.0
        %1570 = vmatprep.subr.mxu0 0.0
        %1571 = vmatpush1.msra.mxu0 0.0
        %1572 = vmatprep.subr.mxu0 0.0
        %1573 = vmatpush1.msra.mxu0 0.0
        %1574 = vmatprep.subr.mxu0 0.0
        %1575 = vmatpush1.msra.mxu0 0.0
        %1576 = vmatprep.subr.mxu0 0.0
        %1577 = vmatpush1.msra.mxu0 0.0
        %1578 = vmatprep.subr.mxu0 0.0
        %1579 = vmatpush1.msra.mxu0 0.0
        %1580 = vmatprep.subr.mxu0 0.0
        %1581 = vmatpush1.msra.mxu0 0.0
        %1582 = vmatprep.subr.mxu0 0.0
        %1583 = vmatpush1.msra.mxu0 0.0
        %1584 = vmatprep.mubr.f32.mxu0 0.0
        %v1585 = vand.u32 %v1086, 4294901760
        %1586 = vmatmul.mubr.f32.gmra.mrb[0].mxu0 %v1585
        %v1587 = vpop.f32.mrb[0].mxu0
        %v1588 = vadd.f32 %v1509, %v1587
        %v1589 = vpop.f32.mrb[0].mxu0
        %1590 = vmatprep.mubr.f32.mxu0 0.0
        %v1591 = vand.u32 %v1089, 4294901760
        %1592 = vmatmul.mubr.f32.gmra.mrb[0].mxu0 %v1591
        %v1593 = vpop.f32.mrb[0].mxu0
        %v1594 = vadd.f32 %v1515, %v1593
        %v1595 = vpop.f32.mrb[0].mxu0
        %1596 = vdwg.mxu0
        %v1597 = vmax.f32 %v1588, 0.0
        %v1598 = vmax.f32 %v1594, 0.0
        %v1599 = vld [vmem:[%s5] sm:$0x1]
        %s1600 = sld [smem:[#allocation2]]
        %v1601 = vstv %s1600
        %vm1602 = vcmask 121856
        %v1604 = vsel %vm1602, %v1599, 0
        %vm1606 = vcmask 1046528
        %v1608 = vsel %vm1606, %v1598, 0
        %1610 = vmatprep.subr.mxu0 0.0
        %v1611 = vand.u32 %v1597, 4294901760
        %1612 = vmatpush1.msra.mxu0 %v1611
        %1613 = vmatprep.subr.mxu0 0.0
        %v1614 = vand.u32 %v1608, 4294901760
        %1615 = vmatpush1.msra.mxu0 %v1614
        %1616 = vmatprep.subr.mxu0 0.0
        %1617 = vmatpush1.msra.mxu0 0.0
        %1618 = vmatprep.subr.mxu0 0.0
        %1619 = vmatpush1.msra.mxu0 0.0
        %1620 = vmatprep.subr.mxu0 0.0
        %1621 = vmatpush1.msra.mxu0 0.0
        %1622 = vmatprep.subr.mxu0 0.0
        %1623 = vmatpush1.msra.mxu0 0.0
        %1624 = vmatprep.subr.mxu0 0.0
        %1625 = vmatpush1.msra.mxu0 0.0
        %1626 = vmatprep.subr.mxu0 0.0
        %1627 = vmatpush1.msra.mxu0 0.0
        %1628 = vmatprep.subr.mxu0 0.0
        %1629 = vmatpush1.msra.mxu0 0.0
        %1630 = vmatprep.subr.mxu0 0.0
        %1631 = vmatpush1.msra.mxu0 0.0
        %1632 = vmatprep.subr.mxu0 0.0
        %1633 = vmatpush1.msra.mxu0 0.0
        %1634 = vmatprep.subr.mxu0 0.0
        %1635 = vmatpush1.msra.mxu0 0.0
        %1636 = vmatprep.subr.mxu0 0.0
        %1637 = vmatpush1.msra.mxu0 0.0
        %1638 = vmatprep.subr.mxu0 0.0
        %1639 = vmatpush1.msra.mxu0 0.0
        %1640 = vmatprep.subr.mxu0 0.0
        %1641 = vmatpush1.msra.mxu0 0.0
        %1642 = vmatprep.subr.mxu0 0.0
        %1643 = vmatpush1.msra.mxu0 0.0
        %1644 = vmatprep.subr.mxu0 0.0
        %1645 = vmatpush1.msra.mxu0 0.0
        %1646 = vmatprep.subr.mxu0 0.0
        %1647 = vmatpush1.msra.mxu0 0.0
        %1648 = vmatprep.subr.mxu0 0.0
        %1649 = vmatpush1.msra.mxu0 0.0
        %1650 = vmatprep.subr.mxu0 0.0
        %1651 = vmatpush1.msra.mxu0 0.0
        %1652 = vmatprep.subr.mxu0 0.0
        %1653 = vmatpush1.msra.mxu0 0.0
        %1654 = vmatprep.subr.mxu0 0.0
        %1655 = vmatpush1.msra.mxu0 0.0
        %1656 = vmatprep.subr.mxu0 0.0
        %1657 = vmatpush1.msra.mxu0 0.0
        %1658 = vmatprep.subr.mxu0 0.0
        %1659 = vmatpush1.msra.mxu0 0.0
        %1660 = vmatprep.subr.mxu0 0.0
        %1661 = vmatpush1.msra.mxu0 0.0
        %1662 = vmatprep.subr.mxu0 0.0
        %1663 = vmatpush1.msra.mxu0 0.0
        %1664 = vmatprep.subr.mxu0 0.0
        %1665 = vmatpush1.msra.mxu0 0.0
        %1666 = vmatprep.subr.mxu0 0.0
        %1667 = vmatpush1.msra.mxu0 0.0
        %1668 = vmatprep.subr.mxu0 0.0
        %1669 = vmatpush1.msra.mxu0 0.0
        %1670 = vmatprep.subr.mxu0 0.0
        %1671 = vmatpush1.msra.mxu0 0.0
        %1672 = vmatprep.subr.mxu0 0.0
        %1673 = vmatpush1.msra.mxu0 0.0
        %1674 = vmatprep.subr.mxu0 0.0
        %1675 = vmatpush1.msra.mxu0 0.0
        %1676 = vmatprep.mubr.f32.mxu0 0.0
        %v1677 = vand.u32 %v1604, 4294901760
        %v1678 = vsub.f32 %v1604, %v1677
        %v1679 = vand.u32 %v1678, 4294901760
        %v1680 = vsub.f32 %v1678, %v1679
        %v1681 = vand.u32 %v1680, 4294901760
        %1682 = vmatmul.mubr.f32.gmra.mrb[0].mxu0 %v1681
        %v1683 = vpop.f32.mrb[0].mxu0
        %v1684 = vadd.f32 %v1601, %v1683
        %v1685 = vpop.f32.mrb[0].mxu0
        %1686 = vdwg.mxu0
        %1687 = vmatprep.subr.mxu0 0.0
        %v1688 = vand.u32 %v1597, 4294901760
        %v1689 = vsub.f32 %v1597, %v1688
        %v1690 = vand.u32 %v1689, 4294901760
        %v1691 = vsub.f32 %v1689, %v1690
        %v1692 = vand.u32 %v1691, 4294901760
        %1693 = vmatpush1.msra.mxu0 %v1692
        %1694 = vmatprep.subr.mxu0 0.0
        %v1695 = vand.u32 %v1608, 4294901760
        %v1696 = vsub.f32 %v1608, %v1695
        %v1697 = vand.u32 %v1696, 4294901760
        %v1698 = vsub.f32 %v1696, %v1697
        %v1699 = vand.u32 %v1698, 4294901760
        %1700 = vmatpush1.msra.mxu0 %v1699
        %1701 = vmatprep.subr.mxu0 0.0
        %1702 = vmatpush1.msra.mxu0 0.0
        %1703 = vmatprep.subr.mxu0 0.0
        %1704 = vmatpush1.msra.mxu0 0.0
        %1705 = vmatprep.subr.mxu0 0.0
        %1706 = vmatpush1.msra.mxu0 0.0
        %1707 = vmatprep.subr.mxu0 0.0
        %1708 = vmatpush1.msra.mxu0 0.0
        %1709 = vmatprep.subr.mxu0 0.0
        %1710 = vmatpush1.msra.mxu0 0.0
        %1711 = vmatprep.subr.mxu0 0.0
        %1712 = vmatpush1.msra.mxu0 0.0
        %1713 = vmatprep.subr.mxu0 0.0
        %1714 = vmatpush1.msra.mxu0 0.0
        %1715 = vmatprep.subr.mxu0 0.0
        %1716 = vmatpush1.msra.mxu0 0.0
        %1717 = vmatprep.subr.mxu0 0.0
        %1718 = vmatpush1.msra.mxu0 0.0
        %1719 = vmatprep.subr.mxu0 0.0
        %1720 = vmatpush1.msra.mxu0 0.0
        %1721 = vmatprep.subr.mxu0 0.0
        %1722 = vmatpush1.msra.mxu0 0.0
        %1723 = vmatprep.subr.mxu0 0.0
        %1724 = vmatpush1.msra.mxu0 0.0
        %1725 = vmatprep.subr.mxu0 0.0
        %1726 = vmatpush1.msra.mxu0 0.0
        %1727 = vmatprep.subr.mxu0 0.0
        %1728 = vmatpush1.msra.mxu0 0.0
        %1729 = vmatprep.subr.mxu0 0.0
        %1730 = vmatpush1.msra.mxu0 0.0
        %1731 = vmatprep.subr.mxu0 0.0
        %1732 = vmatpush1.msra.mxu0 0.0
        %1733 = vmatprep.subr.mxu0 0.0
        %1734 = vmatpush1.msra.mxu0 0.0
        %1735 = vmatprep.subr.mxu0 0.0
        %1736 = vmatpush1.msra.mxu0 0.0
        %1737 = vmatprep.subr.mxu0 0.0
        %1738 = vmatpush1.msra.mxu0 0.0
        %1739 = vmatprep.subr.mxu0 0.0
        %1740 = vmatpush1.msra.mxu0 0.0
        %1741 = vmatprep.subr.mxu0 0.0
        %1742 = vmatpush1.msra.mxu0 0.0
        %1743 = vmatprep.subr.mxu0 0.0
        %1744 = vmatpush1.msra.mxu0 0.0
        %1745 = vmatprep.subr.mxu0 0.0
        %1746 = vmatpush1.msra.mxu0 0.0
        %1747 = vmatprep.subr.mxu0 0.0
        %1748 = vmatpush1.msra.mxu0 0.0
        %1749 = vmatprep.subr.mxu0 0.0
        %1750 = vmatpush1.msra.mxu0 0.0
        %1751 = vmatprep.subr.mxu0 0.0
        %1752 = vmatpush1.msra.mxu0 0.0
        %1753 = vmatprep.subr.mxu0 0.0
        %1754 = vmatpush1.msra.mxu0 0.0
        %1755 = vmatprep.subr.mxu0 0.0
        %1756 = vmatpush1.msra.mxu0 0.0
        %1757 = vmatprep.subr.mxu0 0.0
        %1758 = vmatpush1.msra.mxu0 0.0
        %1759 = vmatprep.subr.mxu0 0.0
        %1760 = vmatpush1.msra.mxu0 0.0
        %1761 = vmatprep.mubr.f32.mxu0 0.0
        %v1762 = vand.u32 %v1604, 4294901760
        %1763 = vmatmul.mubr.f32.gmra.mrb[0].mxu0 %v1762
        %v1764 = vpop.f32.mrb[0].mxu0
        %v1765 = vadd.f32 %v1684, %v1764
        %v1766 = vpop.f32.mrb[0].mxu0
        %1767 = vdwg.mxu0
        %1768 = vmatprep.subr.mxu0 0.0
        %v1769 = vand.u32 %v1597, 4294901760
        %v1770 = vsub.f32 %v1597, %v1769
        %1771 = vmatpush1.msra.mxu0 %v1770
        %1772 = vmatprep.subr.mxu0 0.0
        %v1773 = vand.u32 %v1608, 4294901760
        %v1774 = vsub.f32 %v1608, %v1773
        %1775 = vmatpush1.msra.mxu0 %v1774
        %1776 = vmatprep.subr.mxu0 0.0
        %1777 = vmatpush1.msra.mxu0 0.0
        %1778 = vmatprep.subr.mxu0 0.0
        %1779 = vmatpush1.msra.mxu0 0.0
        %1780 = vmatprep.subr.mxu0 0.0
        %1781 = vmatpush1.msra.mxu0 0.0
        %1782 = vmatprep.subr.mxu0 0.0
        %1783 = vmatpush1.msra.mxu0 0.0
        %1784 = vmatprep.subr.mxu0 0.0
        %1785 = vmatpush1.msra.mxu0 0.0
        %1786 = vmatprep.subr.mxu0 0.0
        %1787 = vmatpush1.msra.mxu0 0.0
        %1788 = vmatprep.subr.mxu0 0.0
        %1789 = vmatpush1.msra.mxu0 0.0
        %1790 = vmatprep.subr.mxu0 0.0
        %1791 = vmatpush1.msra.mxu0 0.0
        %1792 = vmatprep.subr.mxu0 0.0
        %1793 = vmatpush1.msra.mxu0 0.0
        %1794 = vmatprep.subr.mxu0 0.0
        %1795 = vmatpush1.msra.mxu0 0.0
        %1796 = vmatprep.subr.mxu0 0.0
        %1797 = vmatpush1.msra.mxu0 0.0
        %1798 = vmatprep.subr.mxu0 0.0
        %1799 = vmatpush1.msra.mxu0 0.0
        %1800 = vmatprep.subr.mxu0 0.0
        %1801 = vmatpush1.msra.mxu0 0.0
        %1802 = vmatprep.subr.mxu0 0.0
        %1803 = vmatpush1.msra.mxu0 0.0
        %1804 = vmatprep.subr.mxu0 0.0
        %1805 = vmatpush1.msra.mxu0 0.0
        %1806 = vmatprep.subr.mxu0 0.0
        %1807 = vmatpush1.msra.mxu0 0.0
        %1808 = vmatprep.subr.mxu0 0.0
        %1809 = vmatpush1.msra.mxu0 0.0
        %1810 = vmatprep.subr.mxu0 0.0
        %1811 = vmatpush1.msra.mxu0 0.0
        %1812 = vmatprep.subr.mxu0 0.0
        %1813 = vmatpush1.msra.mxu0 0.0
        %1814 = vmatprep.subr.mxu0 0.0
        %1815 = vmatpush1.msra.mxu0 0.0
        %1816 = vmatprep.subr.mxu0 0.0
        %1817 = vmatpush1.msra.mxu0 0.0
        %1818 = vmatprep.subr.mxu0 0.0
        %1819 = vmatpush1.msra.mxu0 0.0
        %1820 = vmatprep.subr.mxu0 0.0
        %1821 = vmatpush1.msra.mxu0 0.0
        %1822 = vmatprep.subr.mxu0 0.0
        %1823 = vmatpush1.msra.mxu0 0.0
        %1824 = vmatprep.subr.mxu0 0.0
        %1825 = vmatpush1.msra.mxu0 0.0
        %1826 = vmatprep.subr.mxu0 0.0
        %1827 = vmatpush1.msra.mxu0 0.0
        %1828 = vmatprep.subr.mxu0 0.0
        %1829 = vmatpush1.msra.mxu0 0.0
        %1830 = vmatprep.subr.mxu0 0.0
        %1831 = vmatpush1.msra.mxu0 0.0
        %1832 = vmatprep.subr.mxu0 0.0
        %1833 = vmatpush1.msra.mxu0 0.0
        %1834 = vmatprep.subr.mxu0 0.0
        %1835 = vmatpush1.msra.mxu0 0.0
        %1836 = vmatprep.mubr.f32.mxu0 0.0
        %v1837 = vand.u32 %v1604, 4294901760
        %v1838 = vsub.f32 %v1604, %v1837
        %1839 = vmatmul.mubr.f32.gmra.mrb[0].mxu0 %v1838
        %v1840 = vpop.f32.mrb[0].mxu0
        %v1841 = vadd.f32 %v1765, %v1840
        %v1842 = vpop.f32.mrb[0].mxu0
        %1843 = vdwg.mxu0
        %1844 = vmatprep.subr.mxu0 0.0
        %v1845 = vand.u32 %v1597, 4294901760
        %1846 = vmatpush1.msra.mxu0 %v1845
        %1847 = vmatprep.subr.mxu0 0.0
        %v1848 = vand.u32 %v1608, 4294901760
        %1849 = vmatpush1.msra.mxu0 %v1848
        %1850 = vmatprep.subr.mxu0 0.0
        %1851 = vmatpush1.msra.mxu0 0.0
        %1852 = vmatprep.subr.mxu0 0.0
        %1853 = vmatpush1.msra.mxu0 0.0
        %1854 = vmatprep.subr.mxu0 0.0
        %1855 = vmatpush1.msra.mxu0 0.0
        %1856 = vmatprep.subr.mxu0 0.0
        %1857 = vmatpush1.msra.mxu0 0.0
        %1858 = vmatprep.subr.mxu0 0.0
        %1859 = vmatpush1.msra.mxu0 0.0
        %1860 = vmatprep.subr.mxu0 0.0
        %1861 = vmatpush1.msra.mxu0 0.0
        %1862 = vmatprep.subr.mxu0 0.0
        %1863 = vmatpush1.msra.mxu0 0.0
        %1864 = vmatprep.subr.mxu0 0.0
        %1865 = vmatpush1.msra.mxu0 0.0
        %1866 = vmatprep.subr.mxu0 0.0
        %1867 = vmatpush1.msra.mxu0 0.0
        %1868 = vmatprep.subr.mxu0 0.0
        %1869 = vmatpush1.msra.mxu0 0.0
        %1870 = vmatprep.subr.mxu0 0.0
        %1871 = vmatpush1.msra.mxu0 0.0
        %1872 = vmatprep.subr.mxu0 0.0
        %1873 = vmatpush1.msra.mxu0 0.0
        %1874 = vmatprep.subr.mxu0 0.0
        %1875 = vmatpush1.msra.mxu0 0.0
        %1876 = vmatprep.subr.mxu0 0.0
        %1877 = vmatpush1.msra.mxu0 0.0
        %1878 = vmatprep.subr.mxu0 0.0
        %1879 = vmatpush1.msra.mxu0 0.0
        %1880 = vmatprep.subr.mxu0 0.0
        %1881 = vmatpush1.msra.mxu0 0.0
        %1882 = vmatprep.subr.mxu0 0.0
        %1883 = vmatpush1.msra.mxu0 0.0
        %1884 = vmatprep.subr.mxu0 0.0
        %1885 = vmatpush1.msra.mxu0 0.0
        %1886 = vmatprep.subr.mxu0 0.0
        %1887 = vmatpush1.msra.mxu0 0.0
        %1888 = vmatprep.subr.mxu0 0.0
        %1889 = vmatpush1.msra.mxu0 0.0
        %1890 = vmatprep.subr.mxu0 0.0
        %1891 = vmatpush1.msra.mxu0 0.0
        %1892 = vmatprep.subr.mxu0 0.0
        %1893 = vmatpush1.msra.mxu0 0.0
        %1894 = vmatprep.subr.mxu0 0.0
        %1895 = vmatpush1.msra.mxu0 0.0
        %1896 = vmatprep.subr.mxu0 0.0
        %1897 = vmatpush1.msra.mxu0 0.0
        %1898 = vmatprep.subr.mxu0 0.0
        %1899 = vmatpush1.msra.mxu0 0.0
        %1900 = vmatprep.subr.mxu0 0.0
        %1901 = vmatpush1.msra.mxu0 0.0
        %1902 = vmatprep.subr.mxu0 0.0
        %1903 = vmatpush1.msra.mxu0 0.0
        %1904 = vmatprep.subr.mxu0 0.0
        %1905 = vmatpush1.msra.mxu0 0.0
        %1906 = vmatprep.subr.mxu0 0.0
        %1907 = vmatpush1.msra.mxu0 0.0
        %1908 = vmatprep.subr.mxu0 0.0
        %1909 = vmatpush1.msra.mxu0 0.0
        %1910 = vmatprep.mubr.f32.mxu0 0.0
        %v1911 = vand.u32 %v1604, 4294901760
        %v1912 = vsub.f32 %v1604, %v1911
        %v1913 = vand.u32 %v1912, 4294901760
        %1914 = vmatmul.mubr.f32.gmra.mrb[0].mxu0 %v1913
        %v1915 = vpop.f32.mrb[0].mxu0
        %v1916 = vadd.f32 %v1841, %v1915
        %v1917 = vpop.f32.mrb[0].mxu0
        %1918 = vdwg.mxu0
        %1919 = vmatprep.subr.mxu0 0.0
        %v1920 = vand.u32 %v1597, 4294901760
        %v1921 = vsub.f32 %v1597, %v1920
        %v1922 = vand.u32 %v1921, 4294901760
        %1923 = vmatpush1.msra.mxu0 %v1922
        %1924 = vmatprep.subr.mxu0 0.0
        %v1925 = vand.u32 %v1608, 4294901760
        %v1926 = vsub.f32 %v1608, %v1925
        %v1927 = vand.u32 %v1926, 4294901760
        %1928 = vmatpush1.msra.mxu0 %v1927
        %1929 = vmatprep.subr.mxu0 0.0
        %1930 = vmatpush1.msra.mxu0 0.0
        %1931 = vmatprep.subr.mxu0 0.0
        %1932 = vmatpush1.msra.mxu0 0.0
        %1933 = vmatprep.subr.mxu0 0.0
        %1934 = vmatpush1.msra.mxu0 0.0
        %1935 = vmatprep.subr.mxu0 0.0
        %1936 = vmatpush1.msra.mxu0 0.0
        %1937 = vmatprep.subr.mxu0 0.0
        %1938 = vmatpush1.msra.mxu0 0.0
        %1939 = vmatprep.subr.mxu0 0.0
        %1940 = vmatpush1.msra.mxu0 0.0
        %1941 = vmatprep.subr.mxu0 0.0
        %1942 = vmatpush1.msra.mxu0 0.0
        %1943 = vmatprep.subr.mxu0 0.0
        %1944 = vmatpush1.msra.mxu0 0.0
        %1945 = vmatprep.subr.mxu0 0.0
        %1946 = vmatpush1.msra.mxu0 0.0
        %1947 = vmatprep.subr.mxu0 0.0
        %1948 = vmatpush1.msra.mxu0 0.0
        %1949 = vmatprep.subr.mxu0 0.0
        %1950 = vmatpush1.msra.mxu0 0.0
        %1951 = vmatprep.subr.mxu0 0.0
        %1952 = vmatpush1.msra.mxu0 0.0
        %1953 = vmatprep.subr.mxu0 0.0
        %1954 = vmatpush1.msra.mxu0 0.0
        %1955 = vmatprep.subr.mxu0 0.0
        %1956 = vmatpush1.msra.mxu0 0.0
        %1957 = vmatprep.subr.mxu0 0.0
        %1958 = vmatpush1.msra.mxu0 0.0
        %1959 = vmatprep.subr.mxu0 0.0
        %1960 = vmatpush1.msra.mxu0 0.0
        %1961 = vmatprep.subr.mxu0 0.0
        %1962 = vmatpush1.msra.mxu0 0.0
        %1963 = vmatprep.subr.mxu0 0.0
        %1964 = vmatpush1.msra.mxu0 0.0
        %1965 = vmatprep.subr.mxu0 0.0
        %1966 = vmatpush1.msra.mxu0 0.0
        %1967 = vmatprep.subr.mxu0 0.0
        %1968 = vmatpush1.msra.mxu0 0.0
        %1969 = vmatprep.subr.mxu0 0.0
        %1970 = vmatpush1.msra.mxu0 0.0
        %1971 = vmatprep.subr.mxu0 0.0
        %1972 = vmatpush1.msra.mxu0 0.0
        %1973 = vmatprep.subr.mxu0 0.0
        %1974 = vmatpush1.msra.mxu0 0.0
        %1975 = vmatprep.subr.mxu0 0.0
        %1976 = vmatpush1.msra.mxu0 0.0
        %1977 = vmatprep.subr.mxu0 0.0
        %1978 = vmatpush1.msra.mxu0 0.0
        %1979 = vmatprep.subr.mxu0 0.0
        %1980 = vmatpush1.msra.mxu0 0.0
        %1981 = vmatprep.subr.mxu0 0.0
        %1982 = vmatpush1.msra.mxu0 0.0
        %1983 = vmatprep.subr.mxu0 0.0
        %1984 = vmatpush1.msra.mxu0 0.0
        %1985 = vmatprep.subr.mxu0 0.0
        %1986 = vmatpush1.msra.mxu0 0.0
        %1987 = vmatprep.subr.mxu0 0.0
        %1988 = vmatpush1.msra.mxu0 0.0
        %1989 = vmatprep.mubr.f32.mxu0 0.0
        %v1990 = vand.u32 %v1604, 4294901760
        %1991 = vmatmul.mubr.f32.gmra.mrb[0].mxu0 %v1990
        %v1992 = vpop.f32.mrb[0].mxu0
        %v1993 = vadd.f32 %v1916, %v1992
        %v1994 = vpop.f32.mrb[0].mxu0
        %1995 = vdwg.mxu0
        %1996 = vmatprep.subr.mxu0 0.0
        %v1997 = vand.u32 %v1597, 4294901760
        %1998 = vmatpush1.msra.mxu0 %v1997
        %1999 = vmatprep.subr.mxu0 0.0
        %v2000 = vand.u32 %v1608, 4294901760
        %2001 = vmatpush1.msra.mxu0 %v2000
        %2002 = vmatprep.subr.mxu0 0.0
        %2003 = vmatpush1.msra.mxu0 0.0
        %2004 = vmatprep.subr.mxu0 0.0
        %2005 = vmatpush1.msra.mxu0 0.0
        %2006 = vmatprep.subr.mxu0 0.0
        %2007 = vmatpush1.msra.mxu0 0.0
        %2008 = vmatprep.subr.mxu0 0.0
        %2009 = vmatpush1.msra.mxu0 0.0
        %2010 = vmatprep.subr.mxu0 0.0
        %2011 = vmatpush1.msra.mxu0 0.0
        %2012 = vmatprep.subr.mxu0 0.0
        %2013 = vmatpush1.msra.mxu0 0.0
        %2014 = vmatprep.subr.mxu0 0.0
        %2015 = vmatpush1.msra.mxu0 0.0
        %2016 = vmatprep.subr.mxu0 0.0
        %2017 = vmatpush1.msra.mxu0 0.0
        %2018 = vmatprep.subr.mxu0 0.0
        %2019 = vmatpush1.msra.mxu0 0.0
        %2020 = vmatprep.subr.mxu0 0.0
        %2021 = vmatpush1.msra.mxu0 0.0
        %2022 = vmatprep.subr.mxu0 0.0
        %2023 = vmatpush1.msra.mxu0 0.0
        %2024 = vmatprep.subr.mxu0 0.0
        %2025 = vmatpush1.msra.mxu0 0.0
        %2026 = vmatprep.subr.mxu0 0.0
        %2027 = vmatpush1.msra.mxu0 0.0
        %2028 = vmatprep.subr.mxu0 0.0
        %2029 = vmatpush1.msra.mxu0 0.0
        %2030 = vmatprep.subr.mxu0 0.0
        %2031 = vmatpush1.msra.mxu0 0.0
        %2032 = vmatprep.subr.mxu0 0.0
        %2033 = vmatpush1.msra.mxu0 0.0
        %2034 = vmatprep.subr.mxu0 0.0
        %2035 = vmatpush1.msra.mxu0 0.0
        %2036 = vmatprep.subr.mxu0 0.0
        %2037 = vmatpush1.msra.mxu0 0.0
        %2038 = vmatprep.subr.mxu0 0.0
        %2039 = vmatpush1.msra.mxu0 0.0
        %2040 = vmatprep.subr.mxu0 0.0
        %2041 = vmatpush1.msra.mxu0 0.0
        %2042 = vmatprep.subr.mxu0 0.0
        %2043 = vmatpush1.msra.mxu0 0.0
        %2044 = vmatprep.subr.mxu0 0.0
        %2045 = vmatpush1.msra.mxu0 0.0
        %2046 = vmatprep.subr.mxu0 0.0
        %2047 = vmatpush1.msra.mxu0 0.0
        %2048 = vmatprep.subr.mxu0 0.0
        %2049 = vmatpush1.msra.mxu0 0.0
        %2050 = vmatprep.subr.mxu0 0.0
        %2051 = vmatpush1.msra.mxu0 0.0
        %2052 = vmatprep.subr.mxu0 0.0
        %2053 = vmatpush1.msra.mxu0 0.0
        %2054 = vmatprep.subr.mxu0 0.0
        %2055 = vmatpush1.msra.mxu0 0.0
        %2056 = vmatprep.subr.mxu0 0.0
        %2057 = vmatpush1.msra.mxu0 0.0
        %2058 = vmatprep.subr.mxu0 0.0
        %2059 = vmatpush1.msra.mxu0 0.0
        %2060 = vmatprep.subr.mxu0 0.0
        %2061 = vmatpush1.msra.mxu0 0.0
        %2062 = vmatprep.mubr.f32.mxu0 0.0
        %v2063 = vand.u32 %v1604, 4294901760
        %2064 = vmatmul.mubr.f32.gmra.mrb[0].mxu0 %v2063
        %v2065 = vpop.f32.mrb[0].mxu0
        %v2066 = vadd.f32 %v1993, %v2065
        %v2067 = vpop.f32.mrb[0].mxu0
        %2068 = vdwg.mxu0
        %2069 = vst [vmem:[%s284] sm:$0x1] %v2066
        %s2070 = sand.u32 %s182, 1
        %s2071 = scalar_lea.sflag [#allocation4], %s2070
        %s2072 = sand.u32 %s182, 1
        %s2073 = scalar_lea.vmem [#allocation3], %s2072
        // Predicated region
        $region49: #{tpu_custom_call.1} parent=47 // pred_check
          %p2074 = pneg %p192
        $region50: #{tpu_custom_call.1} parent=47 // pred_check_branch
          %2076 = sbr.rel (%p2074) target = $region52
        $region51: #{tpu_custom_call.1} parent=47 // pred_region
          %s2078 = ssub.s32 16, 16
          %2079 = vsyncadd %s2071, %s2078
          %s2080 = smul.addr %s22, 16
          %s2081 = scalar_lea.hbm %s7, %s2080
          %s2083 = sshll.u32 %s2073, 4
          %s2084 = int_to_ptr.vmem [resolvable:$true] %s2083
          %2086 = dma.vmem_to_hbm [thread:$0]  %s2084, 16, %s2081, %s2071
        $region52: #{tpu_custom_call.1} parent=47 // pred_fallthru
          _
      $region48: #{tpu_custom_call.1} parent=5 // pred_fallthru
        _
      %p2087 = scmp.le.s32.totalorder 2, %s17
      // Predicated region
      $region53: #{tpu_custom_call.1} parent=5 // pred_check
        %p2088 = pneg %p2087
      $region54: #{tpu_custom_call.1} parent=5 // pred_check_branch
        %2090 = sbr.rel (%p2088) target = $region56
      $region55: #{tpu_custom_call.1} parent=5 // pred_region
        %s2091 = ssub.s32 %s17, 2
        // Predicated region
        $region57: #{tpu_custom_call.1} parent=55 // pred_check
          %p2092 = pneg %p198
        $region58: #{tpu_custom_call.1} parent=55 // pred_check_branch
          %2094 = sbr.rel (%p2092) target = $region60
        $region59: #{tpu_custom_call.1} parent=55 // pred_region
          %s2095 = sand.u32 %s183, 1
          %s2096 = scalar_lea.sflag [#allocation4], %s2095
          %s2097 = sand.u32 %s183, 1
          %s2098 = scalar_lea.vmem [#allocation3], %s2097
          %2099 = dma.done %s2096, 16
        $region60: #{tpu_custom_call.1} parent=55 // pred_fallthru
          _
      $region56: #{tpu_custom_call.1} parent=5 // pred_fallthru
        _
    $region6: #{tpu_custom_call.1} parent=1 // loop_footer
      %s21 = sadd.s32 1, %s17
    $region7: #{tpu_custom_call.1} parent=1 // loop_footer_branch
      %16 = sbr.rel target = $region3
    $region8: #{tpu_custom_call.1} parent=1 // loop_exit
      _
    %2100 = vsyncpa [#allocation4], 1
    %s2101 = scalar_lea.sflag [#allocation4], 1
    %2102 = vsyncpa %s2101, 1

</llo_original>
